<compile_context>
chip_gen: v6e
topology: v6e:2x2x1
jax: 0.10.0
libtpu: 0.0.40
codegen_flags: <defaults>
</compile_context>

<pallas_src>
import jax
import jax.numpy as jnp
from jax.experimental import pallas as pl
from jax.experimental.pallas import tpu as pltpu

# Module hyper-parameters (synthetic, small shapes)
IMAGE_HEIGHT = 16
IMAGE_WIDTH = 16
IN_FEATURES = IMAGE_HEIGHT * IMAGE_WIDTH   # 256 (already a multiple of 128)
HIDDEN = 1000
HIDDEN_PAD = 1024                          # 128-aligned hidden width
NUM_LABELS = 10
BATCH = 2

TN = 256                                   # layer-2 output-column tile
BM_MAX = 256                               # max batch-tile rows per grid step


def _round_up(x, m):
    return (x + m - 1) // m * m


def _sigmoid(x):
    # sigmoid(x) == 0.5 * tanh(0.5 * x) + 0.5 : one EUP op, no overflow path.
    return 0.5 * jnp.tanh(0.5 * x) + 0.5


def mlp_kernel(x_ref, w1_ref, b1_ref, w2q_ref, w2s_ref, b2_ref, w3_ref, b3_ref,
               out_ref, h1_ref, acc3_ref):
    j = pl.program_id(1)

    @pl.when(j == 0)
    def _():
        # Layer 1: computed once per batch tile, kept resident across j steps.
        h1 = jnp.dot(x_ref[...], w1_ref[...], preferred_element_type=jnp.float32)
        h1_ref[...] = _sigmoid(h1 + b1_ref[...]).astype(jnp.bfloat16)
        acc3_ref[...] = jnp.zeros_like(acc3_ref)

    # Layer 2, column block j: dequantize the int8 weight block on the VPU
    # (free — kernel is memory bound) and accumulate in f32 on the MXU.
    w2_blk = (w2q_ref[...].astype(jnp.float32) * w2s_ref[...]).astype(jnp.bfloat16)
    h2_blk = _sigmoid(
        jnp.dot(h1_ref[...], w2_blk, preferred_element_type=jnp.float32)
        + b2_ref[...])

    # Layer 3: partial contribution of this column block (w3 streamed in
    # matching (TN, NUM_LABELS) row blocks; zero-padded rows are harmless).
    acc3_ref[...] += jnp.dot(h2_blk.astype(jnp.bfloat16), w3_ref[...],
                             preferred_element_type=jnp.float32)

    @pl.when(j == pl.num_programs(1) - 1)
    def _():
        out_ref[...] = _sigmoid(acc3_ref[...] + b3_ref[...]).astype(out_ref.dtype)


def neural_network_forward(x_nchw, params):
    """Pallas implementation of NeuralNetwork.forward.

    x_nchw: (B, C, H, W) float32 with C*H*W == IN_FEATURES
    params: padded / quantized params from init_params()
    returns: (B, NUM_LABELS) float32
    """
    b = x_nchw.shape[0]
    x = x_nchw.reshape(b, -1).astype(jnp.bfloat16)   # nn.Flatten() + bf16

    # Batch tile: multiple of 16 (bf16 sublane packing), capped at BM_MAX.
    bm = min(BM_MAX, _round_up(b, 16))
    b_pad = _round_up(b, bm)
    if b_pad != b:
        x = jnp.pad(x, ((0, b_pad - b), (0, 0)))
    nbt = b_pad // bm

    w1, b1 = params["w1"], params["b1"]
    w2q, w2s, b2 = params["w2q"], params["w2s"], params["b2"]
    w3, b3 = params["w3"], params["b3"]

    grid = (nbt, HIDDEN_PAD // TN)

    out = pl.pallas_call(
        mlp_kernel,
        out_shape=jax.ShapeDtypeStruct((b_pad, NUM_LABELS), jnp.float32),
        grid_spec=pltpu.PrefetchScalarGridSpec(
            num_scalar_prefetch=0,
            grid=grid,
            in_specs=[
                pl.BlockSpec((bm, IN_FEATURES), lambda i, j: (i, 0)),        # x
                pl.BlockSpec((IN_FEATURES, HIDDEN_PAD), lambda i, j: (0, 0)),  # w1
                pl.BlockSpec((1, HIDDEN_PAD), lambda i, j: (0, 0)),          # b1
                pl.BlockSpec((HIDDEN_PAD, TN), lambda i, j: (0, j)),         # w2 (int8)
                pl.BlockSpec((1, TN), lambda i, j: (0, j)),                  # w2 scales
                pl.BlockSpec((1, TN), lambda i, j: (0, j)),                  # b2
                pl.BlockSpec((TN, NUM_LABELS), lambda i, j: (j, 0)),         # w3
                pl.BlockSpec((1, NUM_LABELS), lambda i, j: (0, 0)),          # b3
            ],
            out_specs=pl.BlockSpec((bm, NUM_LABELS), lambda i, j: (i, 0)),
            scratch_shapes=[
                pltpu.VMEM((bm, HIDDEN_PAD), jnp.bfloat16),   # h1 (layer-1 activations)
                pltpu.VMEM((bm, NUM_LABELS), jnp.float32),    # layer-3 accumulator
            ],
        ),
        compiler_params=pltpu.CompilerParams(
            dimension_semantics=("parallel", "arbitrary"),
            vmem_limit_bytes=64 << 20,
        ),
    )(x, w1, b1, w2q, w2s, b2, w3, b3)
    return out[:b]


def init_params(key):
    """PyTorch nn.Linear default init: U(-k, k), k = 1/sqrt(fan_in).

    Returns the logical f32 params (for the reference) and the padded kernel
    params: w1/w3 bf16, w2 int8 + per-output-channel f32 scales, biases f32.
    Weights stored as (in, out).  Padded rows/cols are ZERO so sigmoid(0)=0.5
    values in padded hidden lanes contribute nothing downstream.
    """
    def linear(key, fan_in, fan_out):
        kw, kb = jax.random.split(key)
        bound = 1.0 / jnp.sqrt(fan_in)
        w = jax.random.uniform(kw, (fan_in, fan_out), jnp.float32, -bound, bound)
        b = jax.random.uniform(kb, (1, fan_out), jnp.float32, -bound, bound)
        return w, b

    k1, k2, k3 = jax.random.split(key, 3)
    w1, b1 = linear(k1, IN_FEATURES, HIDDEN)
    w2, b2 = linear(k2, HIDDEN, HIDDEN)
    w3, b3 = linear(k3, HIDDEN, NUM_LABELS)
    logical = {"w1": w1, "b1": b1, "w2": w2, "b2": b2, "w3": w3, "b3": b3}

    def pad(a, rows, cols):
        return jnp.pad(a, ((0, rows - a.shape[0]), (0, cols - a.shape[1])))

    # Symmetric per-output-channel int8 quantization of w2 (dominant stream).
    w2_pad = pad(w2, HIDDEN_PAD, HIDDEN_PAD)
    amax = jnp.max(jnp.abs(w2_pad), axis=0, keepdims=True)
    w2s = (jnp.maximum(amax, 1e-30) / 127.0).astype(jnp.float32)
    w2q = jnp.clip(jnp.round(w2_pad / w2s), -127, 127).astype(jnp.int8)

    padded = {
        "w1": pad(w1, IN_FEATURES, HIDDEN_PAD).astype(jnp.bfloat16),
        "b1": pad(b1, 1, HIDDEN_PAD),                      # biases stay f32
        "w2q": w2q,
        "w2s": w2s,
        "b2": pad(b2, 1, HIDDEN_PAD),
        "w3": pad(w3, HIDDEN_PAD, NUM_LABELS).astype(jnp.bfloat16),
        "b3": b3,
    }
    return logical, padded


if __name__ == "__main__":
    key = jax.random.PRNGKey(0)
    kp, kx = jax.random.split(key)
    params_f32, params_pad = init_params(kp)

    # NCHW input, single channel 16x16 image, batch=2 (C*H*W == 256)
    x = jax.random.normal(kx, (BATCH, 1, IMAGE_HEIGHT, IMAGE_WIDTH), jnp.float32)

    logits = neural_network_forward(x, params_pad)
    jax.block_until_ready(logits)
    assert logits.shape == (BATCH, NUM_LABELS)

    # Reference 1: identical quantized/bf16 math (f32 accumulate), outside Pallas.
    w2_deq = (params_pad["w2q"].astype(jnp.float32)
              * params_pad["w2s"]).astype(jnp.bfloat16)
    xf = x.reshape(BATCH, -1).astype(jnp.bfloat16)
    h = jax.nn.sigmoid(
        jnp.dot(xf, params_pad["w1"], preferred_element_type=jnp.float32)
        + params_pad["b1"]).astype(jnp.bfloat16)
    h = jax.nn.sigmoid(
        jnp.dot(h, w2_deq, preferred_element_type=jnp.float32)
        + params_pad["b2"]).astype(jnp.bfloat16)
    ref_q = jax.nn.sigmoid(
        jnp.dot(h, params_pad["w3"], preferred_element_type=jnp.float32)
        + params_pad["b3"])
    assert jnp.allclose(logits, ref_q, atol=1e-2, rtol=1e-2)

    # Reference 2: full-f32 PyTorch-semantics forward (sanity on padding/quant).
    xf32 = x.reshape(BATCH, -1)
    h = jax.nn.sigmoid(xf32 @ params_f32["w1"] + params_f32["b1"])
    h = jax.nn.sigmoid(h @ params_f32["w2"] + params_f32["b2"])
    ref_f32 = jax.nn.sigmoid(h @ params_f32["w3"] + params_f32["b3"])
    assert jnp.allclose(logits, ref_f32, atol=3e-2, rtol=3e-2)

    print("KERNEL_OK")
</pallas_src>

<mosaic_0001>
module attributes {stable_mosaic.version = 11 : i64} {
  func.func @mlp_kernel(%arg0: i32, %arg1: i32, %arg2: memref<16x256xbf16, #tpu.memory_space<vmem>>, %arg3: memref<256x1024xbf16, #tpu.memory_space<vmem>>, %arg4: memref<1x1024xf32, #tpu.memory_space<vmem>>, %arg5: memref<1024x256xi8, #tpu.memory_space<vmem>>, %arg6: memref<1x256xf32, #tpu.memory_space<vmem>>, %arg7: memref<1x256xf32, #tpu.memory_space<vmem>>, %arg8: memref<256x10xbf16, #tpu.memory_space<vmem>>, %arg9: memref<1x10xf32, #tpu.memory_space<vmem>>, %arg10: memref<16x10xf32, #tpu.memory_space<vmem>>, %arg11: memref<16x1024xbf16, #tpu.memory_space<vmem>>, %arg12: memref<16x10xf32, #tpu.memory_space<vmem>>) attributes {dimension_semantics = [#tpu.dimension_semantics<parallel>, #tpu.dimension_semantics<arbitrary>], iteration_bounds = array<i64: 1, 4>, scalar_prefetch = 0 : i64, scratch_operands = 2 : i64, tpu.core_type = #tpu.core_type<tc>, window_params = [{transform_indices = @transform_0, window_bounds = array<i64: 16, 256>}, {pipeline_mode = #tpu.pipeline_mode<synchronous>, transform_indices = @transform_1, window_bounds = array<i64: 256, 1024>}, {pipeline_mode = #tpu.pipeline_mode<synchronous>, transform_indices = @transform_2, window_bounds = array<i64: 1, 1024>}, {transform_indices = @transform_3, window_bounds = array<i64: 1024, 256>}, {transform_indices = @transform_4, window_bounds = array<i64: 1, 256>}, {transform_indices = @transform_5, window_bounds = array<i64: 1, 256>}, {transform_indices = @transform_6, window_bounds = array<i64: 256, 10>}, {pipeline_mode = #tpu.pipeline_mode<synchronous>, transform_indices = @transform_7, window_bounds = array<i64: 1, 10>}, {transform_indices = @transform_8, window_bounds = array<i64: 16, 10>}]} {
    %c0_i32 = arith.constant 0 : i32
    %0 = arith.cmpi eq, %arg1, %c0_i32 : i32
    %1 = arith.extui %0 : i1 to i32
    %c0_i32_0 = arith.constant 0 : i32
    %2 = arith.cmpi ne, %1, %c0_i32_0 : i32
    scf.if %2 {
      %c0_19 = arith.constant 0 : index
      %c0_20 = arith.constant 0 : index
      %30 = vector.load %arg2[%c0_19, %c0_20] : memref<16x256xbf16, #tpu.memory_space<vmem>>, vector<16x256xbf16>
      %c0_21 = arith.constant 0 : index
      %c0_22 = arith.constant 0 : index
      %31 = vector.load %arg3[%c0_21, %c0_22] : memref<256x1024xbf16, #tpu.memory_space<vmem>>, vector<256x1024xbf16>
      %cst_23 = arith.constant dense<0.000000e+00> : vector<16x1024xf32>
      %32 = tpu.matmul %30, %31, %cst_23 {dimension_numbers = #tpu.dot_dimension_numbers<[1], [0], [0], [1], [0, 0, 1, 1], [], []>} : vector<16x256xbf16>, vector<256x1024xbf16>, vector<16x1024xf32> -> vector<16x1024xf32>
      %c0_24 = arith.constant 0 : index
      %c0_25 = arith.constant 0 : index
      %33 = vector.load %arg4[%c0_24, %c0_25] : memref<1x1024xf32, #tpu.memory_space<vmem>>, vector<1x1024xf32>
      %34 = vector.broadcast %33 : vector<1x1024xf32> to vector<16x1024xf32>
      %35 = arith.addf %32, %34 : vector<16x1024xf32>
      %cst_26 = arith.constant 5.000000e-01 : f32
      %36 = vector.broadcast %cst_26 : f32 to vector<16x1024xf32>
      %37 = arith.mulf %36, %35 : vector<16x1024xf32>
      %38 = math.tanh %37 : vector<16x1024xf32>
      %cst_27 = arith.constant 5.000000e-01 : f32
      %39 = vector.broadcast %cst_27 : f32 to vector<16x1024xf32>
      %40 = arith.mulf %39, %38 : vector<16x1024xf32>
      %cst_28 = arith.constant 5.000000e-01 : f32
      %41 = vector.broadcast %cst_28 : f32 to vector<16x1024xf32>
      %42 = arith.addf %40, %41 : vector<16x1024xf32>
      %43 = arith.truncf %42 : vector<16x1024xf32> to vector<16x1024xbf16>
      %c0_29 = arith.constant 0 : index
      %c0_30 = arith.constant 0 : index
      %44 = vector.load %arg11[%c0_29, %c0_30] : memref<16x1024xbf16, #tpu.memory_space<vmem>>, vector<16x1024xbf16>
      tpu.vector_store %arg11[%c0_29, %c0_30], %43 {strides = array<i32>} : memref<16x1024xbf16, #tpu.memory_space<vmem>>, vector<16x1024xbf16>,
      %cst_31 = arith.constant 0.000000e+00 : f32
      %45 = vector.broadcast %cst_31 : f32 to vector<16x10xf32>
      %c0_32 = arith.constant 0 : index
      %c0_33 = arith.constant 0 : index
      %46 = vector.load %arg12[%c0_32, %c0_33] : memref<16x10xf32, #tpu.memory_space<vmem>>, vector<16x10xf32>
      tpu.vector_store %arg12[%c0_32, %c0_33], %45 {strides = array<i32>} : memref<16x10xf32, #tpu.memory_space<vmem>>, vector<16x10xf32>,
    } else {
    }
    %c0 = arith.constant 0 : index
    %c0_1 = arith.constant 0 : index
    %3 = vector.load %arg5[%c0, %c0_1] : memref<1024x256xi8, #tpu.memory_space<vmem>>, vector<1024x256xi8>
    %4 = arith.sitofp %3 : vector<1024x256xi8> to vector<1024x256xf32>
    %c0_2 = arith.constant 0 : index
    %c0_3 = arith.constant 0 : index
    %5 = vector.load %arg6[%c0_2, %c0_3] : memref<1x256xf32, #tpu.memory_space<vmem>>, vector<1x256xf32>
    %6 = vector.broadcast %5 : vector<1x256xf32> to vector<1024x256xf32>
    %7 = arith.mulf %4, %6 : vector<1024x256xf32>
    %8 = arith.truncf %7 : vector<1024x256xf32> to vector<1024x256xbf16>
    %c0_4 = arith.constant 0 : index
    %c0_5 = arith.constant 0 : index
    %9 = vector.load %arg11[%c0_4, %c0_5] : memref<16x1024xbf16, #tpu.memory_space<vmem>>, vector<16x1024xbf16>
    %cst = arith.constant dense<0.000000e+00> : vector<16x256xf32>
    %10 = tpu.matmul %9, %8, %cst {dimension_numbers = #tpu.dot_dimension_numbers<[1], [0], [0], [1], [0, 0, 1, 1], [], []>} : vector<16x1024xbf16>, vector<1024x256xbf16>, vector<16x256xf32> -> vector<16x256xf32>
    %c0_6 = arith.constant 0 : index
    %c0_7 = arith.constant 0 : index
    %11 = vector.load %arg7[%c0_6, %c0_7] : memref<1x256xf32, #tpu.memory_space<vmem>>, vector<1x256xf32>
    %12 = vector.broadcast %11 : vector<1x256xf32> to vector<16x256xf32>
    %13 = arith.addf %10, %12 : vector<16x256xf32>
    %cst_8 = arith.constant 5.000000e-01 : f32
    %14 = vector.broadcast %cst_8 : f32 to vector<16x256xf32>
    %15 = arith.mulf %14, %13 : vector<16x256xf32>
    %16 = math.tanh %15 : vector<16x256xf32>
    %cst_9 = arith.constant 5.000000e-01 : f32
    %17 = vector.broadcast %cst_9 : f32 to vector<16x256xf32>
    %18 = arith.mulf %17, %16 : vector<16x256xf32>
    %cst_10 = arith.constant 5.000000e-01 : f32
    %19 = vector.broadcast %cst_10 : f32 to vector<16x256xf32>
    %20 = arith.addf %18, %19 : vector<16x256xf32>
    %c0_11 = arith.constant 0 : index
    %c0_12 = arith.constant 0 : index
    %21 = vector.load %arg12[%c0_11, %c0_12] : memref<16x10xf32, #tpu.memory_space<vmem>>, vector<16x10xf32>
    %22 = arith.truncf %20 : vector<16x256xf32> to vector<16x256xbf16>
    %c0_13 = arith.constant 0 : index
    %c0_14 = arith.constant 0 : index
    %23 = vector.load %arg8[%c0_13, %c0_14] : memref<256x10xbf16, #tpu.memory_space<vmem>>, vector<256x10xbf16>
    %cst_15 = arith.constant dense<0.000000e+00> : vector<16x10xf32>
    %24 = tpu.matmul %22, %23, %cst_15 {dimension_numbers = #tpu.dot_dimension_numbers<[1], [0], [0], [1], [0, 0, 1, 1], [], []>} : vector<16x256xbf16>, vector<256x10xbf16>, vector<16x10xf32> -> vector<16x10xf32>
    %25 = arith.addf %21, %24 : vector<16x10xf32>
    %c0_16 = arith.constant 0 : index
    %c0_17 = arith.constant 0 : index
    %26 = vector.load %arg12[%c0_16, %c0_17] : memref<16x10xf32, #tpu.memory_space<vmem>>, vector<16x10xf32>
    tpu.vector_store %arg12[%c0_16, %c0_17], %25 {strides = array<i32>} : memref<16x10xf32, #tpu.memory_space<vmem>>, vector<16x10xf32>,
    %c3_i32 = arith.constant 3 : i32
    %27 = arith.cmpi eq, %arg1, %c3_i32 : i32
    %28 = arith.extui %27 : i1 to i32
    %c0_i32_18 = arith.constant 0 : i32
    %29 = arith.cmpi ne, %28, %c0_i32_18 : i32
    scf.if %29 {
      %c0_19 = arith.constant 0 : index
      %c0_20 = arith.constant 0 : index
      %30 = vector.load %arg12[%c0_19, %c0_20] : memref<16x10xf32, #tpu.memory_space<vmem>>, vector<16x10xf32>
      %c0_21 = arith.constant 0 : index
      %c0_22 = arith.constant 0 : index
      %31 = vector.load %arg9[%c0_21, %c0_22] : memref<1x10xf32, #tpu.memory_space<vmem>>, vector<1x10xf32>
      %32 = vector.broadcast %31 : vector<1x10xf32> to vector<16x10xf32>
      %33 = arith.addf %30, %32 : vector<16x10xf32>
      %cst_23 = arith.constant 5.000000e-01 : f32
      %34 = vector.broadcast %cst_23 : f32 to vector<16x10xf32>
      %35 = arith.mulf %34, %33 : vector<16x10xf32>
      %36 = math.tanh %35 : vector<16x10xf32>
      %cst_24 = arith.constant 5.000000e-01 : f32
      %37 = vector.broadcast %cst_24 : f32 to vector<16x10xf32>
      %38 = arith.mulf %37, %36 : vector<16x10xf32>
      %cst_25 = arith.constant 5.000000e-01 : f32
      %39 = vector.broadcast %cst_25 : f32 to vector<16x10xf32>
      %40 = arith.addf %38, %39 : vector<16x10xf32>
      %c0_26 = arith.constant 0 : index
      %c0_27 = arith.constant 0 : index
      %41 = vector.load %arg10[%c0_26, %c0_27] : memref<16x10xf32, #tpu.memory_space<vmem>>, vector<16x10xf32>
      tpu.vector_store %arg10[%c0_26, %c0_27], %40 {strides = array<i32>} : memref<16x10xf32, #tpu.memory_space<vmem>>, vector<16x10xf32>,
    } else {
    }
    return
  }
  func.func @transform_0(%arg0: i32, %arg1: i32) -> (i32, i32) {
    %c0_i32 = arith.constant 0 : i32
    %c0_i32_0 = arith.constant 0 : i32
    return %arg0, %c0_i32 : i32, i32
  }
  func.func @transform_1(%arg0: i32, %arg1: i32) -> (i32, i32) {
    %c0_i32 = arith.constant 0 : i32
    %c0_i32_0 = arith.constant 0 : i32
    %c0_i32_1 = arith.constant 0 : i32
    return %c0_i32, %c0_i32_0 : i32, i32
  }
  func.func @transform_2(%arg0: i32, %arg1: i32) -> (i32, i32) {
    %c0_i32 = arith.constant 0 : i32
    %c0_i32_0 = arith.constant 0 : i32
    %c0_i32_1 = arith.constant 0 : i32
    return %c0_i32, %c0_i32_0 : i32, i32
  }
  func.func @transform_3(%arg0: i32, %arg1: i32) -> (i32, i32) {
    %c0_i32 = arith.constant 0 : i32
    %c0_i32_0 = arith.constant 0 : i32
    return %c0_i32, %arg1 : i32, i32
  }
  func.func @transform_4(%arg0: i32, %arg1: i32) -> (i32, i32) {
    %c0_i32 = arith.constant 0 : i32
    %c0_i32_0 = arith.constant 0 : i32
    return %c0_i32, %arg1 : i32, i32
  }
  func.func @transform_5(%arg0: i32, %arg1: i32) -> (i32, i32) {
    %c0_i32 = arith.constant 0 : i32
    %c0_i32_0 = arith.constant 0 : i32
    return %c0_i32, %arg1 : i32, i32
  }
  func.func @transform_6(%arg0: i32, %arg1: i32) -> (i32, i32) {
    %c0_i32 = arith.constant 0 : i32
    %c0_i32_0 = arith.constant 0 : i32
    return %arg1, %c0_i32 : i32, i32
  }
  func.func @transform_7(%arg0: i32, %arg1: i32) -> (i32, i32) {
    %c0_i32 = arith.constant 0 : i32
    %c0_i32_0 = arith.constant 0 : i32
    %c0_i32_1 = arith.constant 0 : i32
    return %c0_i32, %c0_i32_0 : i32, i32
  }
  func.func @transform_8(%arg0: i32, %arg1: i32) -> (i32, i32) {
    %c0_i32 = arith.constant 0 : i32
    %c0_i32_0 = arith.constant 0 : i32
    return %arg0, %c0_i32 : i32, i32
  }
}

</mosaic_0001>

<llo_original>
// kernel: tpu_custom_call.1
$region0: #{tpu_custom_call.1}
  #allocation0 [shape = 'u32[]', space=smem, size = 0x4, offset = 0x4, fixed_abs, tag = 'smem constant byte address 0x4 - core index']
  #allocation1 [shape = 'u32[144,128]{1,0:T(1,128)}', space=vmem, size = 0x12000, scoped, tag = 'internal scratch']
  #allocation2 [shape = 'bf16[16,1024]{1,0:T(8,128)(2,1)}', space=vmem, size = 0x8000, scoped, tag = 'scratch operand']
  #allocation3 [shape = 'f32[16,10]{1,0:T(8,128)}', space=vmem, size = 0x2000, scoped, tag = 'scratch operand']
  %s0 = inlined_call_operand.vmem [shape: bf16[16,256], index: 0, kind: input, shape index: {}]
  %s1 = inlined_call_operand.hbm [shape: bf16[256,1024], index: 1, kind: input, shape index: {}]
  %s2 = inlined_call_operand.vmem [shape: f32[1,1024], index: 2, kind: input, shape index: {}]
  %s3 = inlined_call_operand.hbm [shape: s8[1024,1024], index: 3, kind: input, shape index: {}]
  %s4 = inlined_call_operand.vmem [shape: f32[1,1024], index: 4, kind: input, shape index: {}]
  %s5 = inlined_call_operand.vmem [shape: f32[1,1024], index: 5, kind: input, shape index: {}]
  %s6 = inlined_call_operand.vmem [shape: bf16[1024,10], index: 6, kind: input, shape index: {}]
  %s7 = inlined_call_operand.vmem [shape: f32[1,10], index: 7, kind: input, shape index: {}]
  %s8 = inlined_call_operand.hbm [shape: f32[16,10], index: 8, kind: output, shape index: {}]
  %s9 = sld [smem:[#allocation0]]
  $region81: #{tpu_custom_call.1} parent=0
    _
  %s11 = ssub.s32 1, %s9
  %s12 = scalar_select 0, %s11, %s9
  $region1: #{tpu_custom_call.1} parent=0
    #allocation4 [shape = 'u8[524288]{0}', space=vmem, size = 0x80000, scoped, tag = 'input window, operand 1, single buffered']
    #allocation5 [shape = 's32[2]{0}', space=sflag, size = 0x8, scoped, tag = 'scoped memory for tpu_custom_call.1']
    #allocation6 [shape = 's32[2]{0}', space=sflag, size = 0x8, scoped, tag = 'scoped memory for tpu_custom_call.1']
    #allocation7 [shape = 'u8[524288]{0}', space=vmem, size = 0x80000, scoped, tag = 'input window, operand 3']
    #allocation8 [shape = 's32[2]{0}', space=sflag, size = 0x8, scoped, tag = 'scoped memory for tpu_custom_call.1']
    #allocation9 [shape = 'u8[8192]{0}', space=vmem, size = 0x2000, scoped, tag = 'output window, operand 0, single buffered']
    %13 = vsyncpa [#allocation5], 0
    %14 = vsyncpa [#allocation8], 0
    %s15 = scalar_lea.sflag [#allocation8], 1
    %16 = vsyncpa %s15, 0
    %17 = vsyncpa [#allocation6], 0
    loop: start=0, step=1, limit=6
    $region2: #{tpu_custom_call.1} parent=1 // loop_pre_header
      _
    $region3: #{tpu_custom_call.1} parent=1 // loop_header
      %s19 = sphi 0, %s23
      %p20 = scmp.ge.s32.totalorder %s19, 6
      %s26 = sphi 0, %s38
      %s27 = sphi 0, %s34
      %s28 = sphi 0, %s26
      %s29 = sphi 0, %s27
      %s30 = sphi 0, %s28
      %s31 = sphi 0, %s29
      %s41 = sphi 0, %s43
      %s44 = sphi 0, %s41
      %s45 = sphi 0, %s44
      %s61 = sphi 0, %s45
      %s65 = sphi 0, %s65
      %s67 = sphi 0, %s65
      %s68 = sphi 0, %s67
      %s82 = sphi 0, %s68
      %s86 = sphi 0, %s86
      %s88 = sphi 0, %s86
      %s89 = sphi 0, %s88
      %s103 = sphi 0, %s89
      %s109 = sphi 0, %s111
      %s112 = sphi 0, %s109
      %s113 = sphi 0, %s112
      %s129 = sphi 0, %s113
      %s135 = sphi 0, %s137
      %s138 = sphi 0, %s135
      %s139 = sphi 0, %s138
      %s155 = sphi 0, %s139
      %s161 = sphi 0, %s163
      %s164 = sphi 0, %s161
      %s165 = sphi 0, %s164
      %s181 = sphi 0, %s165
      %s187 = sphi 0, %s189
      %s190 = sphi 0, %s187
      %s191 = sphi 0, %s190
      %s207 = sphi 0, %s191
      %s211 = sphi 0, %s211
      %s213 = sphi 0, %s211
      %s214 = sphi 0, %s213
      %s228 = sphi 0, %s214
      %s234 = sphi 0, %s236
      %s237 = sphi 0, %s234
      %s238 = sphi 0, %s237
      %s254 = sphi 0, %s238
    $region4: #{tpu_custom_call.1} parent=1 // loop_header_branch
      %22 = sbr.rel (%p20) target = $region8
    $region5: #{tpu_custom_call.1} parent=1 // loop_body
      %s24 = ssub.s32 %s19, 1
      %s25 = ssub.s32 %s19, 2
      %s32 = sadd.s32 1, %s27
      %p33 = scmp.ge.s32.totalorder %s32, 4
      %s34 = scalar_select %p33, 0, %s32
      %s35 = sadd.s32 1, %s26
      %s36 = scalar_select %p33, %s35, %s26
      %p37 = scmp.ge.s32.totalorder %s36, 1
      %s38 = scalar_select %p37, 0, %s36
      %s39 = ssub.s32 %s26, %s38
      %p40 = scmp.eq.s32.totalorder %s39, 0
      %s42 = sadd.s32 %s41, 1
      %s43 = scalar_select %p40, %s41, %s42
      %p46 = pneg %p40
      %p47 = scmp.eq.s32.totalorder %s19, 3
      %p48 = por %p46, %p47
      %p49 = scmp.ne.s32.totalorder %s41, %s44
      %p50 = scmp.eq.s32.totalorder %s19, 0
      %p51 = por %p49, %p50
      %p52 = scmp.ne.s32.totalorder %s41, %s44
      %p53 = scmp.eq.s32.totalorder %s24, 3
      %p54 = por %p52, %p53
      %p55 = scmp.ne.s32.totalorder %s44, %s45
      %p56 = scmp.eq.s32.totalorder %s24, 0
      %p57 = por %p55, %p56
      %p58 = scmp.ne.s32.totalorder %s44, %s45
      %p59 = scmp.eq.s32.totalorder %s25, 3
      %p60 = por %p58, %p59
      %p62 = scmp.ne.s32.totalorder %s45, %s61
      %p63 = scmp.eq.s32.totalorder %s25, 0
      %p64 = por %p62, %p63
      %s66 = sadd.s32 %s65, 1
      %p69 = scmp.eq.s32.totalorder %s19, 3
      %p70 = scmp.ne.s32.totalorder %s65, %s67
      %p71 = scmp.eq.s32.totalorder %s19, 0
      %p72 = por %p70, %p71
      %p73 = scmp.ne.s32.totalorder %s65, %s67
      %p74 = scmp.eq.s32.totalorder %s24, 3
      %p75 = por %p73, %p74
      %p76 = scmp.ne.s32.totalorder %s67, %s68
      %p77 = scmp.eq.s32.totalorder %s24, 0
      %p78 = por %p76, %p77
      %p79 = scmp.ne.s32.totalorder %s67, %s68
      %p80 = scmp.eq.s32.totalorder %s25, 3
      %p81 = por %p79, %p80
      %p83 = scmp.ne.s32.totalorder %s68, %s82
      %p84 = scmp.eq.s32.totalorder %s25, 0
      %p85 = por %p83, %p84
      %s87 = sadd.s32 %s86, 1
      %p90 = scmp.eq.s32.totalorder %s19, 3
      %p91 = scmp.ne.s32.totalorder %s86, %s88
      %p92 = scmp.eq.s32.totalorder %s19, 0
      %p93 = por %p91, %p92
      %p94 = scmp.ne.s32.totalorder %s86, %s88
      %p95 = scmp.eq.s32.totalorder %s24, 3
      %p96 = por %p94, %p95
      %p97 = scmp.ne.s32.totalorder %s88, %s89
      %p98 = scmp.eq.s32.totalorder %s24, 0
      %p99 = por %p97, %p98
      %p100 = scmp.ne.s32.totalorder %s88, %s89
      %p101 = scmp.eq.s32.totalorder %s25, 3
      %p102 = por %p100, %p101
      %p104 = scmp.ne.s32.totalorder %s89, %s103
      %p105 = scmp.eq.s32.totalorder %s25, 0
      %p106 = por %p104, %p105
      %s107 = ssub.s32 %s27, %s34
      %p108 = scmp.eq.s32.totalorder %s107, 0
      %s110 = sadd.s32 %s109, 1
      %s111 = scalar_select %p108, %s109, %s110
      %p114 = pneg %p108
      %p115 = scmp.eq.s32.totalorder %s19, 3
      %p116 = por %p114, %p115
      %p117 = scmp.ne.s32.totalorder %s109, %s112
      %p118 = scmp.eq.s32.totalorder %s19, 0
      %p119 = por %p117, %p118
      %p120 = scmp.ne.s32.totalorder %s109, %s112
      %p121 = scmp.eq.s32.totalorder %s24, 3
      %p122 = por %p120, %p121
      %p123 = scmp.ne.s32.totalorder %s112, %s113
      %p124 = scmp.eq.s32.totalorder %s24, 0
      %p125 = por %p123, %p124
      %p126 = scmp.ne.s32.totalorder %s112, %s113
      %p127 = scmp.eq.s32.totalorder %s25, 3
      %p128 = por %p126, %p127
      %p130 = scmp.ne.s32.totalorder %s113, %s129
      %p131 = scmp.eq.s32.totalorder %s25, 0
      %p132 = por %p130, %p131
      %s133 = ssub.s32 %s27, %s34
      %p134 = scmp.eq.s32.totalorder %s133, 0
      %s136 = sadd.s32 %s135, 1
      %s137 = scalar_select %p134, %s135, %s136
      %p140 = pneg %p134
      %p141 = scmp.eq.s32.totalorder %s19, 3
      %p142 = por %p140, %p141
      %p143 = scmp.ne.s32.totalorder %s135, %s138
      %p144 = scmp.eq.s32.totalorder %s19, 0
      %p145 = por %p143, %p144
      %p146 = scmp.ne.s32.totalorder %s135, %s138
      %p147 = scmp.eq.s32.totalorder %s24, 3
      %p148 = por %p146, %p147
      %p149 = scmp.ne.s32.totalorder %s138, %s139
      %p150 = scmp.eq.s32.totalorder %s24, 0
      %p151 = por %p149, %p150
      %p152 = scmp.ne.s32.totalorder %s138, %s139
      %p153 = scmp.eq.s32.totalorder %s25, 3
      %p154 = por %p152, %p153
      %p156 = scmp.ne.s32.totalorder %s139, %s155
      %p157 = scmp.eq.s32.totalorder %s25, 0
      %p158 = por %p156, %p157
      %s159 = ssub.s32 %s27, %s34
      %p160 = scmp.eq.s32.totalorder %s159, 0
      %s162 = sadd.s32 %s161, 1
      %s163 = scalar_select %p160, %s161, %s162
      %p166 = pneg %p160
      %p167 = scmp.eq.s32.totalorder %s19, 3
      %p168 = por %p166, %p167
      %p169 = scmp.ne.s32.totalorder %s161, %s164
      %p170 = scmp.eq.s32.totalorder %s19, 0
      %p171 = por %p169, %p170
      %p172 = scmp.ne.s32.totalorder %s161, %s164
      %p173 = scmp.eq.s32.totalorder %s24, 3
      %p174 = por %p172, %p173
      %p175 = scmp.ne.s32.totalorder %s164, %s165
      %p176 = scmp.eq.s32.totalorder %s24, 0
      %p177 = por %p175, %p176
      %p178 = scmp.ne.s32.totalorder %s164, %s165
      %p179 = scmp.eq.s32.totalorder %s25, 3
      %p180 = por %p178, %p179
      %p182 = scmp.ne.s32.totalorder %s165, %s181
      %p183 = scmp.eq.s32.totalorder %s25, 0
      %p184 = por %p182, %p183
      %s185 = ssub.s32 %s27, %s34
      %p186 = scmp.eq.s32.totalorder %s185, 0
      %s188 = sadd.s32 %s187, 1
      %s189 = scalar_select %p186, %s187, %s188
      %p192 = pneg %p186
      %p193 = scmp.eq.s32.totalorder %s19, 3
      %p194 = por %p192, %p193
      %p195 = scmp.ne.s32.totalorder %s187, %s190
      %p196 = scmp.eq.s32.totalorder %s19, 0
      %p197 = por %p195, %p196
      %p198 = scmp.ne.s32.totalorder %s187, %s190
      %p199 = scmp.eq.s32.totalorder %s24, 3
      %p200 = por %p198, %p199
      %p201 = scmp.ne.s32.totalorder %s190, %s191
      %p202 = scmp.eq.s32.totalorder %s24, 0
      %p203 = por %p201, %p202
      %p204 = scmp.ne.s32.totalorder %s190, %s191
      %p205 = scmp.eq.s32.totalorder %s25, 3
      %p206 = por %p204, %p205
      %p208 = scmp.ne.s32.totalorder %s191, %s207
      %p209 = scmp.eq.s32.totalorder %s25, 0
      %p210 = por %p208, %p209
      %s212 = sadd.s32 %s211, 1
      %p215 = scmp.eq.s32.totalorder %s19, 3
      %p216 = scmp.ne.s32.totalorder %s211, %s213
      %p217 = scmp.eq.s32.totalorder %s19, 0
      %p218 = por %p216, %p217
      %p219 = scmp.ne.s32.totalorder %s211, %s213
      %p220 = scmp.eq.s32.totalorder %s24, 3
      %p221 = por %p219, %p220
      %p222 = scmp.ne.s32.totalorder %s213, %s214
      %p223 = scmp.eq.s32.totalorder %s24, 0
      %p224 = por %p222, %p223
      %p225 = scmp.ne.s32.totalorder %s213, %s214
      %p226 = scmp.eq.s32.totalorder %s25, 3
      %p227 = por %p225, %p226
      %p229 = scmp.ne.s32.totalorder %s214, %s228
      %p230 = scmp.eq.s32.totalorder %s25, 0
      %p231 = por %p229, %p230
      %s232 = ssub.s32 %s26, %s38
      %p233 = scmp.eq.s32.totalorder %s232, 0
      %s235 = sadd.s32 %s234, 1
      %s236 = scalar_select %p233, %s234, %s235
      %p239 = pneg %p233
      %p240 = scmp.eq.s32.totalorder %s19, 3
      %p241 = por %p239, %p240
      %p242 = scmp.ne.s32.totalorder %s234, %s237
      %p243 = scmp.eq.s32.totalorder %s19, 0
      %p244 = por %p242, %p243
      %p245 = scmp.ne.s32.totalorder %s234, %s237
      %p246 = scmp.eq.s32.totalorder %s24, 3
      %p247 = por %p245, %p246
      %p248 = scmp.ne.s32.totalorder %s237, %s238
      %p249 = scmp.eq.s32.totalorder %s24, 0
      %p250 = por %p248, %p249
      %p251 = scmp.ne.s32.totalorder %s237, %s238
      %p252 = scmp.eq.s32.totalorder %s25, 3
      %p253 = por %p251, %p252
      %p255 = scmp.ne.s32.totalorder %s238, %s254
      %p256 = scmp.eq.s32.totalorder %s25, 0
      %p257 = por %p255, %p256
      %p258 = scmp.le.s32.totalorder 1, %s19
      %p259 = scmp.lt.s32.totalorder %s19, 5
      %p260 = pnand %p258, %p259
      %p261 = pneg %p260
      // Predicated region
      $region9: #{tpu_custom_call.1} parent=5 // pred_check
        _
      $region10: #{tpu_custom_call.1} parent=5 // pred_check_branch
        %263 = sbr.rel (%p260) target = $region12
      $region11: #{tpu_custom_call.1} parent=5 // pred_region
        %s264 = ssub.s32 %s19, 1
        // Predicated region
        $region13: #{tpu_custom_call.1} parent=11 // pred_check
          %p265 = pneg %p57
        $region14: #{tpu_custom_call.1} parent=11 // pred_check_branch
          %267 = sbr.rel (%p265) target = $region16
        $region15: #{tpu_custom_call.1} parent=11 // pred_region
          %s268 = smul.u32 2, %s28
          %p269 = scmp.lt.s32.totalorder %s268, 1
          %s270 = scalar_select %p269, %s268, 1
          %s271 = smul.addr %s270, 2
          %s272 = smul.addr %s271, 4
          %s273 = scalar_lea.vmem %s0, %s272
          %s274 = smul.u32 2, %s28
        $region16: #{tpu_custom_call.1} parent=11 // pred_fallthru
          _
        // Predicated region
        $region17: #{tpu_custom_call.1} parent=11 // pred_check
          %p275 = pneg %p78
        $region18: #{tpu_custom_call.1} parent=11 // pred_check_branch
          %277 = sbr.rel (%p275) target = $region20
        $region19: #{tpu_custom_call.1} parent=11 // pred_region
          %s279 = ssub.s32 16384, 16384
          %280 = vsyncadd [#allocation5], %s279
          %s281 = sshll.u32 [#allocation4], 4
          %s282 = int_to_ptr.vmem [resolvable:$true] %s281
          %287 = dma.hbm_to_vmem [thread:$0]  %s1, 16384, %s282, [#allocation5], 512, 512, 32
        $region20: #{tpu_custom_call.1} parent=11 // pred_fallthru
          _
        // Predicated region
        $region21: #{tpu_custom_call.1} parent=11 // pred_check
          %p288 = pneg %p99
        $region22: #{tpu_custom_call.1} parent=11 // pred_check_branch
          %290 = sbr.rel (%p288) target = $region24
        $region23: #{tpu_custom_call.1} parent=11 // pred_region
          _
        $region24: #{tpu_custom_call.1} parent=11 // pred_fallthru
          _
        // Predicated region
        $region25: #{tpu_custom_call.1} parent=11 // pred_check
          %p291 = pneg %p224
        $region26: #{tpu_custom_call.1} parent=11 // pred_check_branch
          %293 = sbr.rel (%p291) target = $region28
        $region27: #{tpu_custom_call.1} parent=11 // pred_region
          _
        $region28: #{tpu_custom_call.1} parent=11 // pred_fallthru
          _
      $region12: #{tpu_custom_call.1} parent=5 // pred_fallthru
        _
      %p294 = scmp.lt.s32.totalorder %s19, 4
      // Predicated region
      $region29: #{tpu_custom_call.1} parent=5 // pred_check
        %p295 = pneg %p294
      $region30: #{tpu_custom_call.1} parent=5 // pred_check_branch
        %297 = sbr.rel (%p295) target = $region32
      $region31: #{tpu_custom_call.1} parent=5 // pred_region
        // Predicated region
        $region33: #{tpu_custom_call.1} parent=31 // pred_check
          %p298 = pneg %p119
        $region34: #{tpu_custom_call.1} parent=31 // pred_check_branch
          %300 = sbr.rel (%p298) target = $region36
        $region35: #{tpu_custom_call.1} parent=31 // pred_region
          %s301 = sand.u32 %s109, 1
          %s302 = scalar_lea.sflag [#allocation8], %s301
          %s303 = sand.u32 %s109, 1
          %s304 = smul.addr %s303, 512
          %s305 = scalar_lea.vmem [#allocation7], %s304
          %s306 = smul.u32 2, %s27
          %s308 = ssub.s32 8192, 8192
          %309 = vsyncadd %s302, %s308
          %s310 = smul.addr %s306, 128
          %s311 = scalar_lea.hbm %s3, %s310
          %s312 = sshll.u32 %s305, 4
          %s313 = int_to_ptr.vmem [resolvable:$true] %s312
          %318 = dma.hbm_to_vmem [thread:$0]  %s311, 8192, %s313, %s302, 1024, 256, 16
        $region36: #{tpu_custom_call.1} parent=31 // pred_fallthru
          _
        // Predicated region
        $region37: #{tpu_custom_call.1} parent=31 // pred_check
          %p319 = pneg %p145
        $region38: #{tpu_custom_call.1} parent=31 // pred_check_branch
          %321 = sbr.rel (%p319) target = $region40
        $region39: #{tpu_custom_call.1} parent=31 // pred_region
          %s322 = smul.u32 2, %s27
          %p323 = scmp.lt.s32.totalorder %s322, 7
          %s324 = scalar_select %p323, %s322, 7
          %s325 = scalar_lea.vmem %s4, %s324
          %s326 = smul.u32 2, %s27
        $region40: #{tpu_custom_call.1} parent=31 // pred_fallthru
          _
        // Predicated region
        $region41: #{tpu_custom_call.1} parent=31 // pred_check
          %p327 = pneg %p171
        $region42: #{tpu_custom_call.1} parent=31 // pred_check_branch
          %329 = sbr.rel (%p327) target = $region44
        $region43: #{tpu_custom_call.1} parent=31 // pred_region
          %s330 = smul.u32 2, %s27
          %p331 = scmp.lt.s32.totalorder %s330, 7
          %s332 = scalar_select %p331, %s330, 7
          %s333 = scalar_lea.vmem %s5, %s332
          %s334 = smul.u32 2, %s27
        $region44: #{tpu_custom_call.1} parent=31 // pred_fallthru
          _
        // Predicated region
        $region45: #{tpu_custom_call.1} parent=31 // pred_check
          %p335 = pneg %p197
        $region46: #{tpu_custom_call.1} parent=31 // pred_check_branch
          %337 = sbr.rel (%p335) target = $region48
        $region47: #{tpu_custom_call.1} parent=31 // pred_region
          %s338 = smul.u32 32, %s27
          %p339 = scmp.lt.s32.totalorder %s338, 127
          %s340 = scalar_select %p339, %s338, 127
          %s341 = smul.addr %s340, 4
          %s342 = scalar_lea.vmem %s6, %s341
          %s343 = smul.u32 32, %s27
        $region48: #{tpu_custom_call.1} parent=31 // pred_fallthru
          _
      $region32: #{tpu_custom_call.1} parent=5 // pred_fallthru
        _
      %p344 = scmp.le.s32.totalorder 1, %s19
      %p345 = scmp.lt.s32.totalorder %s19, 5
      %p346 = pnand %p344, %p345
      %p347 = pneg %p346
      // Predicated region
      $region49: #{tpu_custom_call.1} parent=5 // pred_check
        _
      $region50: #{tpu_custom_call.1} parent=5 // pred_check_branch
        %349 = sbr.rel (%p346) target = $region52
      $region51: #{tpu_custom_call.1} parent=5 // pred_region
        %s350 = ssub.s32 %s19, 1
        // Predicated region
        $region53: #{tpu_custom_call.1} parent=51 // pred_check
          %p351 = pneg %p78
        $region54: #{tpu_custom_call.1} parent=51 // pred_check_branch
          %353 = sbr.rel (%p351) target = $region56
        $region55: #{tpu_custom_call.1} parent=51 // pred_region
          %354 = dma.done [#allocation5], 16384
        $region56: #{tpu_custom_call.1} parent=51 // pred_fallthru
          _
        %s355 = sand.u32 %s112, 1
        %s356 = scalar_lea.sflag [#allocation8], %s355
        %s357 = sand.u32 %s112, 1
        %s358 = smul.addr %s357, 512
        %s359 = scalar_lea.vmem [#allocation7], %s358
        // Predicated region
        $region57: #{tpu_custom_call.1} parent=51 // pred_check
          %p360 = pneg %p125
        $region58: #{tpu_custom_call.1} parent=51 // pred_check_branch
          %362 = sbr.rel (%p360) target = $region60
        $region59: #{tpu_custom_call.1} parent=51 // pred_region
          %363 = dma.done %s356, 8192
        $region60: #{tpu_custom_call.1} parent=51 // pred_fallthru
          _
        %s364 = smul.u32 2, %s28
        %p365 = scmp.lt.s32.totalorder %s364, 1
        %s366 = scalar_select %p365, %s364, 1
        %s367 = smul.addr %s366, 2
        %s368 = smul.addr %s367, 4
        %s369 = scalar_lea.vmem %s0, %s368
        %p370 = pneg %p57
        %p371 = pneg %p54
        %p372 = pneg %p78
        %p373 = pneg %p75
        %p374 = pneg %p99
        %p375 = pneg %p96
        %s376 = sand.u32 %s112, 1
        %s377 = scalar_lea.sflag [#allocation8], %s376
        %s378 = sand.u32 %s112, 1
        %s379 = smul.addr %s378, 512
        %s380 = scalar_lea.vmem [#allocation7], %s379
        %p381 = pneg %p125
        %p382 = pneg %p122
        %s383 = smul.u32 2, %s29
        %p384 = scmp.lt.s32.totalorder %s383, 7
        %s385 = scalar_select %p384, %s383, 7
        %s386 = scalar_lea.vmem %s4, %s385
        %p387 = pneg %p151
        %p388 = pneg %p148
        %s389 = smul.u32 2, %s29
        %p390 = scmp.lt.s32.totalorder %s389, 7
        %s391 = scalar_select %p390, %s389, 7
        %s392 = scalar_lea.vmem %s5, %s391
        %p393 = pneg %p177
        %p394 = pneg %p174
        %s395 = smul.u32 32, %s29
        %p396 = scmp.lt.s32.totalorder %s395, 127
        %s397 = scalar_select %p396, %s395, 127
        %s398 = smul.addr %s397, 4
        %s399 = scalar_lea.vmem %s6, %s398
        %p400 = pneg %p203
        %p401 = pneg %p200
        %p402 = pneg %p224
        %p403 = pneg %p221
        %p404 = pneg %p250
        %p405 = pneg %p247
        %s406 = smul.u32 2, %s28
        %p407 = scmp.lt.s32.totalorder %s406, 1
        %s408 = scalar_select %p407, %s406, 1
        %s409 = smul.addr %s408, 2
        %s410 = smul.addr %s409, 4
        %s411 = scalar_lea.vmem %s0, %s410
        %s412 = smul.u32 2, %s28
        %s413 = smul.u32 2, %s29
        %s414 = smul.u32 2, %s29
        %p415 = scmp.lt.s32.totalorder %s414, 7
        %s416 = scalar_select %p415, %s414, 7
        %s417 = scalar_lea.vmem %s4, %s416
        %s418 = smul.u32 2, %s29
        %s419 = smul.u32 2, %s29
        %p420 = scmp.lt.s32.totalorder %s419, 7
        %s421 = scalar_select %p420, %s419, 7
        %s422 = scalar_lea.vmem %s5, %s421
        %s423 = smul.u32 2, %s29
        %s424 = smul.u32 32, %s29
        %p425 = scmp.lt.s32.totalorder %s424, 127
        %s426 = scalar_select %p425, %s424, 127
        %s427 = smul.addr %s426, 4
        %s428 = scalar_lea.vmem %s6, %s427
        %s429 = smul.u32 32, %s29
        %s430 = smul.u32 2, %s28
        %p432 = scmp.eq.s32.totalorder %s29, 0
        // Predicated region
        $region61: #{tpu_custom_call.1} parent=51 // pred_check
          %p433 = pneg %p432
        $region62: #{tpu_custom_call.1} parent=51 // pred_check_branch
          %435 = sbr.rel (%p433) target = $region64
        $region63: #{tpu_custom_call.1} parent=51 // pred_region
          %v436 = vld [vmem:[%s411] sm:$0xff]
          %v437 = vld [vmem:[%s411 + $0x8] sm:$0xff]
          %v438 = vld [vmem:[#allocation4] sm:$0xff]
          %v439 = vld [vmem:[#allocation4 + $0x8] sm:$0xff]
          %v440 = vld [vmem:[#allocation4 + $0x10] sm:$0xff]
          %v441 = vld [vmem:[#allocation4 + $0x18] sm:$0xff]
          %v442 = vld [vmem:[#allocation4 + $0x20] sm:$0xff]
          %v443 = vld [vmem:[#allocation4 + $0x28] sm:$0xff]
          %v444 = vld [vmem:[#allocation4 + $0x30] sm:$0xff]
          %v445 = vld [vmem:[#allocation4 + $0x38] sm:$0xff]
          %v446 = vld [vmem:[#allocation4 + $0x40] sm:$0xff]
          %v447 = vld [vmem:[#allocation4 + $0x48] sm:$0xff]
          %v448 = vld [vmem:[#allocation4 + $0x50] sm:$0xff]
          %v449 = vld [vmem:[#allocation4 + $0x58] sm:$0xff]
          %v450 = vld [vmem:[#allocation4 + $0x60] sm:$0xff]
          %v451 = vld [vmem:[#allocation4 + $0x68] sm:$0xff]
          %v452 = vld [vmem:[#allocation4 + $0x70] sm:$0xff]
          %v453 = vld [vmem:[#allocation4 + $0x78] sm:$0xff]
          %v454 = vld [vmem:[#allocation4 + $0x80] sm:$0xff]
          %v455 = vld [vmem:[#allocation4 + $0x88] sm:$0xff]
          %v456 = vld [vmem:[#allocation4 + $0x90] sm:$0xff]
          %v457 = vld [vmem:[#allocation4 + $0x98] sm:$0xff]
          %v458 = vld [vmem:[#allocation4 + $0xa0] sm:$0xff]
          %v459 = vld [vmem:[#allocation4 + $0xa8] sm:$0xff]
          %v460 = vld [vmem:[#allocation4 + $0xb0] sm:$0xff]
          %v461 = vld [vmem:[#allocation4 + $0xb8] sm:$0xff]
          %v462 = vld [vmem:[#allocation4 + $0xc0] sm:$0xff]
          %v463 = vld [vmem:[#allocation4 + $0xc8] sm:$0xff]
          %v464 = vld [vmem:[#allocation4 + $0xd0] sm:$0xff]
          %v465 = vld [vmem:[#allocation4 + $0xd8] sm:$0xff]
          %v466 = vld [vmem:[#allocation4 + $0xe0] sm:$0xff]
          %v467 = vld [vmem:[#allocation4 + $0xe8] sm:$0xff]
          %v468 = vld [vmem:[#allocation4 + $0xf0] sm:$0xff]
          %v469 = vld [vmem:[#allocation4 + $0xf8] sm:$0xff]
          %v470 = vld [vmem:[#allocation4 + $0x100] sm:$0xff]
          %v471 = vld [vmem:[#allocation4 + $0x108] sm:$0xff]
          %v472 = vld [vmem:[#allocation4 + $0x110] sm:$0xff]
          %v473 = vld [vmem:[#allocation4 + $0x118] sm:$0xff]
          %v474 = vld [vmem:[#allocation4 + $0x120] sm:$0xff]
          %v475 = vld [vmem:[#allocation4 + $0x128] sm:$0xff]
          %v476 = vld [vmem:[#allocation4 + $0x130] sm:$0xff]
          %v477 = vld [vmem:[#allocation4 + $0x138] sm:$0xff]
          %v478 = vld [vmem:[#allocation4 + $0x140] sm:$0xff]
          %v479 = vld [vmem:[#allocation4 + $0x148] sm:$0xff]
          %v480 = vld [vmem:[#allocation4 + $0x150] sm:$0xff]
          %v481 = vld [vmem:[#allocation4 + $0x158] sm:$0xff]
          %v482 = vld [vmem:[#allocation4 + $0x160] sm:$0xff]
          %v483 = vld [vmem:[#allocation4 + $0x168] sm:$0xff]
          %v484 = vld [vmem:[#allocation4 + $0x170] sm:$0xff]
          %v485 = vld [vmem:[#allocation4 + $0x178] sm:$0xff]
          %v486 = vld [vmem:[#allocation4 + $0x180] sm:$0xff]
          %v487 = vld [vmem:[#allocation4 + $0x188] sm:$0xff]
          %v488 = vld [vmem:[#allocation4 + $0x190] sm:$0xff]
          %v489 = vld [vmem:[#allocation4 + $0x198] sm:$0xff]
          %v490 = vld [vmem:[#allocation4 + $0x1a0] sm:$0xff]
          %v491 = vld [vmem:[#allocation4 + $0x1a8] sm:$0xff]
          %v492 = vld [vmem:[#allocation4 + $0x1b0] sm:$0xff]
          %v493 = vld [vmem:[#allocation4 + $0x1b8] sm:$0xff]
          %v494 = vld [vmem:[#allocation4 + $0x1c0] sm:$0xff]
          %v495 = vld [vmem:[#allocation4 + $0x1c8] sm:$0xff]
          %v496 = vld [vmem:[#allocation4 + $0x1d0] sm:$0xff]
          %v497 = vld [vmem:[#allocation4 + $0x1d8] sm:$0xff]
          %v498 = vld [vmem:[#allocation4 + $0x1e0] sm:$0xff]
          %v499 = vld [vmem:[#allocation4 + $0x1e8] sm:$0xff]
          %v500 = vld [vmem:[#allocation4 + $0x1f0] sm:$0xff]
          %v501 = vld [vmem:[#allocation4 + $0x1f8] sm:$0xff]
          %v502 = vld [vmem:[#allocation4 + $0x200] sm:$0xff]
          %v503 = vld [vmem:[#allocation4 + $0x208] sm:$0xff]
          %v504 = vld [vmem:[#allocation4 + $0x210] sm:$0xff]
          %v505 = vld [vmem:[#allocation4 + $0x218] sm:$0xff]
          %v506 = vld [vmem:[#allocation4 + $0x220] sm:$0xff]
          %v507 = vld [vmem:[#allocation4 + $0x228] sm:$0xff]
          %v508 = vld [vmem:[#allocation4 + $0x230] sm:$0xff]
          %v509 = vld [vmem:[#allocation4 + $0x238] sm:$0xff]
          %v510 = vld [vmem:[#allocation4 + $0x240] sm:$0xff]
          %v511 = vld [vmem:[#allocation4 + $0x248] sm:$0xff]
          %v512 = vld [vmem:[#allocation4 + $0x250] sm:$0xff]
          %v513 = vld [vmem:[#allocation4 + $0x258] sm:$0xff]
          %v514 = vld [vmem:[#allocation4 + $0x260] sm:$0xff]
          %v515 = vld [vmem:[#allocation4 + $0x268] sm:$0xff]
          %v516 = vld [vmem:[#allocation4 + $0x270] sm:$0xff]
          %v517 = vld [vmem:[#allocation4 + $0x278] sm:$0xff]
          %v518 = vld [vmem:[#allocation4 + $0x280] sm:$0xff]
          %v519 = vld [vmem:[#allocation4 + $0x288] sm:$0xff]
          %v520 = vld [vmem:[#allocation4 + $0x290] sm:$0xff]
          %v521 = vld [vmem:[#allocation4 + $0x298] sm:$0xff]
          %v522 = vld [vmem:[#allocation4 + $0x2a0] sm:$0xff]
          %v523 = vld [vmem:[#allocation4 + $0x2a8] sm:$0xff]
          %v524 = vld [vmem:[#allocation4 + $0x2b0] sm:$0xff]
          %v525 = vld [vmem:[#allocation4 + $0x2b8] sm:$0xff]
          %v526 = vld [vmem:[#allocation4 + $0x2c0] sm:$0xff]
          %v527 = vld [vmem:[#allocation4 + $0x2c8] sm:$0xff]
          %v528 = vld [vmem:[#allocation4 + $0x2d0] sm:$0xff]
          %v529 = vld [vmem:[#allocation4 + $0x2d8] sm:$0xff]
          %v530 = vld [vmem:[#allocation4 + $0x2e0] sm:$0xff]
          %v531 = vld [vmem:[#allocation4 + $0x2e8] sm:$0xff]
          %v532 = vld [vmem:[#allocation4 + $0x2f0] sm:$0xff]
          %v533 = vld [vmem:[#allocation4 + $0x2f8] sm:$0xff]
          %v534 = vld [vmem:[#allocation4 + $0x300] sm:$0xff]
          %v535 = vld [vmem:[#allocation4 + $0x308] sm:$0xff]
          %v536 = vld [vmem:[#allocation4 + $0x310] sm:$0xff]
          %v537 = vld [vmem:[#allocation4 + $0x318] sm:$0xff]
          %v538 = vld [vmem:[#allocation4 + $0x320] sm:$0xff]
          %v539 = vld [vmem:[#allocation4 + $0x328] sm:$0xff]
          %v540 = vld [vmem:[#allocation4 + $0x330] sm:$0xff]
          %v541 = vld [vmem:[#allocation4 + $0x338] sm:$0xff]
          %v542 = vld [vmem:[#allocation4 + $0x340] sm:$0xff]
          %v543 = vld [vmem:[#allocation4 + $0x348] sm:$0xff]
          %v544 = vld [vmem:[#allocation4 + $0x350] sm:$0xff]
          %v545 = vld [vmem:[#allocation4 + $0x358] sm:$0xff]
          %v546 = vld [vmem:[#allocation4 + $0x360] sm:$0xff]
          %v547 = vld [vmem:[#allocation4 + $0x368] sm:$0xff]
          %v548 = vld [vmem:[#allocation4 + $0x370] sm:$0xff]
          %v549 = vld [vmem:[#allocation4 + $0x378] sm:$0xff]
          %v550 = vld [vmem:[#allocation4 + $0x380] sm:$0xff]
          %v551 = vld [vmem:[#allocation4 + $0x388] sm:$0xff]
          %v552 = vld [vmem:[#allocation4 + $0x390] sm:$0xff]
          %v553 = vld [vmem:[#allocation4 + $0x398] sm:$0xff]
          %v554 = vld [vmem:[#allocation4 + $0x3a0] sm:$0xff]
          %v555 = vld [vmem:[#allocation4 + $0x3a8] sm:$0xff]
          %v556 = vld [vmem:[#allocation4 + $0x3b0] sm:$0xff]
          %v557 = vld [vmem:[#allocation4 + $0x3b8] sm:$0xff]
          %v558 = vld [vmem:[#allocation4 + $0x3c0] sm:$0xff]
          %v559 = vld [vmem:[#allocation4 + $0x3c8] sm:$0xff]
          %v560 = vld [vmem:[#allocation4 + $0x3d0] sm:$0xff]
          %v561 = vld [vmem:[#allocation4 + $0x3d8] sm:$0xff]
          %v562 = vld [vmem:[#allocation4 + $0x3e0] sm:$0xff]
          %v563 = vld [vmem:[#allocation4 + $0x3e8] sm:$0xff]
          %v564 = vld [vmem:[#allocation4 + $0x3f0] sm:$0xff]
          %v565 = vld [vmem:[#allocation4 + $0x3f8] sm:$0xff]
          %v566 = vld [vmem:[%s2] sm:$0xff]
          %v568 = vlaneseq
          %v569 = vshrl.u32 %v568, 7
          %v570 = vsub.s32 0, %v569
          %v571 = vrot.slane %v566, %v570
          %v572 = vlaneseq
          %v573 = vshrl.u32 %v572, 7
          %v574 = vsub.s32 1, %v573
          %v575 = vrot.slane %v566, %v574
          %v576 = vlaneseq
          %v577 = vshrl.u32 %v576, 7
          %v578 = vsub.s32 2, %v577
          %v579 = vrot.slane %v566, %v578
          %v580 = vlaneseq
          %v581 = vshrl.u32 %v580, 7
          %v582 = vsub.s32 3, %v581
          %v583 = vrot.slane %v566, %v582
          %v584 = vlaneseq
          %v585 = vshrl.u32 %v584, 7
          %v586 = vsub.s32 4, %v585
          %v587 = vrot.slane %v566, %v586
          %v588 = vlaneseq
          %v589 = vshrl.u32 %v588, 7
          %v590 = vsub.s32 5, %v589
          %v591 = vrot.slane %v566, %v590
          %v592 = vlaneseq
          %v593 = vshrl.u32 %v592, 7
          %v594 = vsub.s32 6, %v593
          %v595 = vrot.slane %v566, %v594
          %v596 = vlaneseq
          %v597 = vshrl.u32 %v596, 7
          %v598 = vsub.s32 7, %v597
          %v599 = vrot.slane %v566, %v598
          %v610 = vunpack.c.l.b16 %v436
          %v611 = vunpack.c.h.b16 %v436
          %v612 = vunpack.c.l.b16 %v437
          %v613 = vunpack.c.h.b16 %v437
          %v614 = vpack.c.b16 %v612, %v610
          %v615 = vpack.c.b16 %v613, %v611
          %v746 = vunpack.c.l.b16 %v438
          %v747 = vunpack.c.h.b16 %v438
          %v748 = vunpack.c.l.b16 %v439
          %v749 = vunpack.c.h.b16 %v439
          %v750 = vunpack.c.l.b16 %v440
          %v751 = vunpack.c.h.b16 %v440
          %v752 = vunpack.c.l.b16 %v441
          %v753 = vunpack.c.h.b16 %v441
          %v754 = vunpack.c.l.b16 %v442
          %v755 = vunpack.c.h.b16 %v442
          %v756 = vunpack.c.l.b16 %v443
          %v757 = vunpack.c.h.b16 %v443
          %v758 = vunpack.c.l.b16 %v444
          %v759 = vunpack.c.h.b16 %v444
          %v760 = vunpack.c.l.b16 %v445
          %v761 = vunpack.c.h.b16 %v445
          %v762 = vunpack.c.l.b16 %v446
          %v763 = vunpack.c.h.b16 %v446
          %v764 = vunpack.c.l.b16 %v447
          %v765 = vunpack.c.h.b16 %v447
          %v766 = vunpack.c.l.b16 %v448
          %v767 = vunpack.c.h.b16 %v448
          %v768 = vunpack.c.l.b16 %v449
          %v769 = vunpack.c.h.b16 %v449
          %v770 = vunpack.c.l.b16 %v450
          %v771 = vunpack.c.h.b16 %v450
          %v772 = vunpack.c.l.b16 %v451
          %v773 = vunpack.c.h.b16 %v451
          %v774 = vunpack.c.l.b16 %v452
          %v775 = vunpack.c.h.b16 %v452
          %v776 = vunpack.c.l.b16 %v453
          %v777 = vunpack.c.h.b16 %v453
          %v778 = vunpack.c.l.b16 %v454
          %v779 = vunpack.c.h.b16 %v454
          %v780 = vunpack.c.l.b16 %v455
          %v781 = vunpack.c.h.b16 %v455
          %v782 = vunpack.c.l.b16 %v456
          %v783 = vunpack.c.h.b16 %v456
          %v784 = vunpack.c.l.b16 %v457
          %v785 = vunpack.c.h.b16 %v457
          %v786 = vunpack.c.l.b16 %v458
          %v787 = vunpack.c.h.b16 %v458
          %v788 = vunpack.c.l.b16 %v459
          %v789 = vunpack.c.h.b16 %v459
          %v790 = vunpack.c.l.b16 %v460
          %v791 = vunpack.c.h.b16 %v460
          %v792 = vunpack.c.l.b16 %v461
          %v793 = vunpack.c.h.b16 %v461
          %v794 = vunpack.c.l.b16 %v462
          %v795 = vunpack.c.h.b16 %v462
          %v796 = vunpack.c.l.b16 %v463
          %v797 = vunpack.c.h.b16 %v463
          %v798 = vunpack.c.l.b16 %v464
          %v799 = vunpack.c.h.b16 %v464
          %v800 = vunpack.c.l.b16 %v465
          %v801 = vunpack.c.h.b16 %v465
          %v802 = vunpack.c.l.b16 %v466
          %v803 = vunpack.c.h.b16 %v466
          %v804 = vunpack.c.l.b16 %v467
          %v805 = vunpack.c.h.b16 %v467
          %v806 = vunpack.c.l.b16 %v468
          %v807 = vunpack.c.h.b16 %v468
          %v808 = vunpack.c.l.b16 %v469
          %v809 = vunpack.c.h.b16 %v469
          %v810 = vunpack.c.l.b16 %v470
          %v811 = vunpack.c.h.b16 %v470
          %v812 = vunpack.c.l.b16 %v471
          %v813 = vunpack.c.h.b16 %v471
          %v814 = vunpack.c.l.b16 %v472
          %v815 = vunpack.c.h.b16 %v472
          %v816 = vunpack.c.l.b16 %v473
          %v817 = vunpack.c.h.b16 %v473
          %v818 = vunpack.c.l.b16 %v474
          %v819 = vunpack.c.h.b16 %v474
          %v820 = vunpack.c.l.b16 %v475
          %v821 = vunpack.c.h.b16 %v475
          %v822 = vunpack.c.l.b16 %v476
          %v823 = vunpack.c.h.b16 %v476
          %v824 = vunpack.c.l.b16 %v477
          %v825 = vunpack.c.h.b16 %v477
          %v826 = vunpack.c.l.b16 %v478
          %v827 = vunpack.c.h.b16 %v478
          %v828 = vunpack.c.l.b16 %v479
          %v829 = vunpack.c.h.b16 %v479
          %v830 = vunpack.c.l.b16 %v480
          %v831 = vunpack.c.h.b16 %v480
          %v832 = vunpack.c.l.b16 %v481
          %v833 = vunpack.c.h.b16 %v481
          %v834 = vunpack.c.l.b16 %v482
          %v835 = vunpack.c.h.b16 %v482
          %v836 = vunpack.c.l.b16 %v483
          %v837 = vunpack.c.h.b16 %v483
          %v838 = vunpack.c.l.b16 %v484
          %v839 = vunpack.c.h.b16 %v484
          %v840 = vunpack.c.l.b16 %v485
          %v841 = vunpack.c.h.b16 %v485
          %v842 = vunpack.c.l.b16 %v486
          %v843 = vunpack.c.h.b16 %v486
          %v844 = vunpack.c.l.b16 %v487
          %v845 = vunpack.c.h.b16 %v487
          %v846 = vunpack.c.l.b16 %v488
          %v847 = vunpack.c.h.b16 %v488
          %v848 = vunpack.c.l.b16 %v489
          %v849 = vunpack.c.h.b16 %v489
          %v850 = vunpack.c.l.b16 %v490
          %v851 = vunpack.c.h.b16 %v490
          %v852 = vunpack.c.l.b16 %v491
          %v853 = vunpack.c.h.b16 %v491
          %v854 = vunpack.c.l.b16 %v492
          %v855 = vunpack.c.h.b16 %v492
          %v856 = vunpack.c.l.b16 %v493
          %v857 = vunpack.c.h.b16 %v493
          %v858 = vunpack.c.l.b16 %v494
          %v859 = vunpack.c.h.b16 %v494
          %v860 = vunpack.c.l.b16 %v495
          %v861 = vunpack.c.h.b16 %v495
          %v862 = vunpack.c.l.b16 %v496
          %v863 = vunpack.c.h.b16 %v496
          %v864 = vunpack.c.l.b16 %v497
          %v865 = vunpack.c.h.b16 %v497
          %v866 = vunpack.c.l.b16 %v498
          %v867 = vunpack.c.h.b16 %v498
          %v868 = vunpack.c.l.b16 %v499
          %v869 = vunpack.c.h.b16 %v499
          %v870 = vunpack.c.l.b16 %v500
          %v871 = vunpack.c.h.b16 %v500
          %v872 = vunpack.c.l.b16 %v501
          %v873 = vunpack.c.h.b16 %v501
          %v874 = vunpack.c.l.b16 %v502
          %v875 = vunpack.c.h.b16 %v502
          %v876 = vunpack.c.l.b16 %v503
          %v877 = vunpack.c.h.b16 %v503
          %v878 = vunpack.c.l.b16 %v504
          %v879 = vunpack.c.h.b16 %v504
          %v880 = vunpack.c.l.b16 %v505
          %v881 = vunpack.c.h.b16 %v505
          %v882 = vunpack.c.l.b16 %v506
          %v883 = vunpack.c.h.b16 %v506
          %v884 = vunpack.c.l.b16 %v507
          %v885 = vunpack.c.h.b16 %v507
          %v886 = vunpack.c.l.b16 %v508
          %v887 = vunpack.c.h.b16 %v508
          %v888 = vunpack.c.l.b16 %v509
          %v889 = vunpack.c.h.b16 %v509
          %v890 = vunpack.c.l.b16 %v510
          %v891 = vunpack.c.h.b16 %v510
          %v892 = vunpack.c.l.b16 %v511
          %v893 = vunpack.c.h.b16 %v511
          %v894 = vunpack.c.l.b16 %v512
          %v895 = vunpack.c.h.b16 %v512
          %v896 = vunpack.c.l.b16 %v513
          %v897 = vunpack.c.h.b16 %v513
          %v898 = vunpack.c.l.b16 %v514
          %v899 = vunpack.c.h.b16 %v514
          %v900 = vunpack.c.l.b16 %v515
          %v901 = vunpack.c.h.b16 %v515
          %v902 = vunpack.c.l.b16 %v516
          %v903 = vunpack.c.h.b16 %v516
          %v904 = vunpack.c.l.b16 %v517
          %v905 = vunpack.c.h.b16 %v517
          %v906 = vunpack.c.l.b16 %v518
          %v907 = vunpack.c.h.b16 %v518
          %v908 = vunpack.c.l.b16 %v519
          %v909 = vunpack.c.h.b16 %v519
          %v910 = vunpack.c.l.b16 %v520
          %v911 = vunpack.c.h.b16 %v520
          %v912 = vunpack.c.l.b16 %v521
          %v913 = vunpack.c.h.b16 %v521
          %v914 = vunpack.c.l.b16 %v522
          %v915 = vunpack.c.h.b16 %v522
          %v916 = vunpack.c.l.b16 %v523
          %v917 = vunpack.c.h.b16 %v523
          %v918 = vunpack.c.l.b16 %v524
          %v919 = vunpack.c.h.b16 %v524
          %v920 = vunpack.c.l.b16 %v525
          %v921 = vunpack.c.h.b16 %v525
          %v922 = vunpack.c.l.b16 %v526
          %v923 = vunpack.c.h.b16 %v526
          %v924 = vunpack.c.l.b16 %v527
          %v925 = vunpack.c.h.b16 %v527
          %v926 = vunpack.c.l.b16 %v528
          %v927 = vunpack.c.h.b16 %v528
          %v928 = vunpack.c.l.b16 %v529
          %v929 = vunpack.c.h.b16 %v529
          %v930 = vunpack.c.l.b16 %v530
          %v931 = vunpack.c.h.b16 %v530
          %v932 = vunpack.c.l.b16 %v531
          %v933 = vunpack.c.h.b16 %v531
          %v934 = vunpack.c.l.b16 %v532
          %v935 = vunpack.c.h.b16 %v532
          %v936 = vunpack.c.l.b16 %v533
          %v937 = vunpack.c.h.b16 %v533
          %v938 = vunpack.c.l.b16 %v534
          %v939 = vunpack.c.h.b16 %v534
          %v940 = vunpack.c.l.b16 %v535
          %v941 = vunpack.c.h.b16 %v535
          %v942 = vunpack.c.l.b16 %v536
          %v943 = vunpack.c.h.b16 %v536
          %v944 = vunpack.c.l.b16 %v537
          %v945 = vunpack.c.h.b16 %v537
          %v946 = vunpack.c.l.b16 %v538
          %v947 = vunpack.c.h.b16 %v538
          %v948 = vunpack.c.l.b16 %v539
          %v949 = vunpack.c.h.b16 %v539
          %v950 = vunpack.c.l.b16 %v540
          %v951 = vunpack.c.h.b16 %v540
          %v952 = vunpack.c.l.b16 %v541
          %v953 = vunpack.c.h.b16 %v541
          %v954 = vunpack.c.l.b16 %v542
          %v955 = vunpack.c.h.b16 %v542
          %v956 = vunpack.c.l.b16 %v543
          %v957 = vunpack.c.h.b16 %v543
          %v958 = vunpack.c.l.b16 %v544
          %v959 = vunpack.c.h.b16 %v544
          %v960 = vunpack.c.l.b16 %v545
          %v961 = vunpack.c.h.b16 %v545
          %v962 = vunpack.c.l.b16 %v546
          %v963 = vunpack.c.h.b16 %v546
          %v964 = vunpack.c.l.b16 %v547
          %v965 = vunpack.c.h.b16 %v547
          %v966 = vunpack.c.l.b16 %v548
          %v967 = vunpack.c.h.b16 %v548
          %v968 = vunpack.c.l.b16 %v549
          %v969 = vunpack.c.h.b16 %v549
          %v970 = vunpack.c.l.b16 %v550
          %v971 = vunpack.c.h.b16 %v550
          %v972 = vunpack.c.l.b16 %v551
          %v973 = vunpack.c.h.b16 %v551
          %v974 = vunpack.c.l.b16 %v552
          %v975 = vunpack.c.h.b16 %v552
          %v976 = vunpack.c.l.b16 %v553
          %v977 = vunpack.c.h.b16 %v553
          %v978 = vunpack.c.l.b16 %v554
          %v979 = vunpack.c.h.b16 %v554
          %v980 = vunpack.c.l.b16 %v555
          %v981 = vunpack.c.h.b16 %v555
          %v982 = vunpack.c.l.b16 %v556
          %v983 = vunpack.c.h.b16 %v556
          %v984 = vunpack.c.l.b16 %v557
          %v985 = vunpack.c.h.b16 %v557
          %v986 = vunpack.c.l.b16 %v558
          %v987 = vunpack.c.h.b16 %v558
          %v988 = vunpack.c.l.b16 %v559
          %v989 = vunpack.c.h.b16 %v559
          %v990 = vunpack.c.l.b16 %v560
          %v991 = vunpack.c.h.b16 %v560
          %v992 = vunpack.c.l.b16 %v561
          %v993 = vunpack.c.h.b16 %v561
          %v994 = vunpack.c.l.b16 %v562
          %v995 = vunpack.c.h.b16 %v562
          %v996 = vunpack.c.l.b16 %v563
          %v997 = vunpack.c.h.b16 %v563
          %v998 = vunpack.c.l.b16 %v564
          %v999 = vunpack.c.h.b16 %v564
          %v1000 = vunpack.c.l.b16 %v565
          %v1001 = vunpack.c.h.b16 %v565
          %v1002 = vpack.c.b16 %v754, %v746
          %v1003 = vpack.c.b16 %v755, %v747
          %v1004 = vpack.c.b16 %v756, %v748
          %v1005 = vpack.c.b16 %v757, %v749
          %v1006 = vpack.c.b16 %v758, %v750
          %v1007 = vpack.c.b16 %v759, %v751
          %v1008 = vpack.c.b16 %v760, %v752
          %v1009 = vpack.c.b16 %v761, %v753
          %v1010 = vpack.c.b16 %v770, %v762
          %v1011 = vpack.c.b16 %v771, %v763
          %v1012 = vpack.c.b16 %v772, %v764
          %v1013 = vpack.c.b16 %v773, %v765
          %v1014 = vpack.c.b16 %v774, %v766
          %v1015 = vpack.c.b16 %v775, %v767
          %v1016 = vpack.c.b16 %v776, %v768
          %v1017 = vpack.c.b16 %v777, %v769
          %v1018 = vpack.c.b16 %v786, %v778
          %v1019 = vpack.c.b16 %v787, %v779
          %v1020 = vpack.c.b16 %v788, %v780
          %v1021 = vpack.c.b16 %v789, %v781
          %v1022 = vpack.c.b16 %v790, %v782
          %v1023 = vpack.c.b16 %v791, %v783
          %v1024 = vpack.c.b16 %v792, %v784
          %v1025 = vpack.c.b16 %v793, %v785
          %v1026 = vpack.c.b16 %v802, %v794
          %v1027 = vpack.c.b16 %v803, %v795
          %v1028 = vpack.c.b16 %v804, %v796
          %v1029 = vpack.c.b16 %v805, %v797
          %v1030 = vpack.c.b16 %v806, %v798
          %v1031 = vpack.c.b16 %v807, %v799
          %v1032 = vpack.c.b16 %v808, %v800
          %v1033 = vpack.c.b16 %v809, %v801
          %v1034 = vpack.c.b16 %v818, %v810
          %v1035 = vpack.c.b16 %v819, %v811
          %v1036 = vpack.c.b16 %v820, %v812
          %v1037 = vpack.c.b16 %v821, %v813
          %v1038 = vpack.c.b16 %v822, %v814
          %v1039 = vpack.c.b16 %v823, %v815
          %v1040 = vpack.c.b16 %v824, %v816
          %v1041 = vpack.c.b16 %v825, %v817
          %v1042 = vpack.c.b16 %v834, %v826
          %v1043 = vpack.c.b16 %v835, %v827
          %v1044 = vpack.c.b16 %v836, %v828
          %v1045 = vpack.c.b16 %v837, %v829
          %v1046 = vpack.c.b16 %v838, %v830
          %v1047 = vpack.c.b16 %v839, %v831
          %v1048 = vpack.c.b16 %v840, %v832
          %v1049 = vpack.c.b16 %v841, %v833
          %v1050 = vpack.c.b16 %v850, %v842
          %v1051 = vpack.c.b16 %v851, %v843
          %v1052 = vpack.c.b16 %v852, %v844
          %v1053 = vpack.c.b16 %v853, %v845
          %v1054 = vpack.c.b16 %v854, %v846
          %v1055 = vpack.c.b16 %v855, %v847
          %v1056 = vpack.c.b16 %v856, %v848
          %v1057 = vpack.c.b16 %v857, %v849
          %v1058 = vpack.c.b16 %v866, %v858
          %v1059 = vpack.c.b16 %v867, %v859
          %v1060 = vpack.c.b16 %v868, %v860
          %v1061 = vpack.c.b16 %v869, %v861
          %v1062 = vpack.c.b16 %v870, %v862
          %v1063 = vpack.c.b16 %v871, %v863
          %v1064 = vpack.c.b16 %v872, %v864
          %v1065 = vpack.c.b16 %v873, %v865
          %v1066 = vpack.c.b16 %v882, %v874
          %v1067 = vpack.c.b16 %v883, %v875
          %v1068 = vpack.c.b16 %v884, %v876
          %v1069 = vpack.c.b16 %v885, %v877
          %v1070 = vpack.c.b16 %v886, %v878
          %v1071 = vpack.c.b16 %v887, %v879
          %v1072 = vpack.c.b16 %v888, %v880
          %v1073 = vpack.c.b16 %v889, %v881
          %v1074 = vpack.c.b16 %v898, %v890
          %v1075 = vpack.c.b16 %v899, %v891
          %v1076 = vpack.c.b16 %v900, %v892
          %v1077 = vpack.c.b16 %v901, %v893
          %v1078 = vpack.c.b16 %v902, %v894
          %v1079 = vpack.c.b16 %v903, %v895
          %v1080 = vpack.c.b16 %v904, %v896
          %v1081 = vpack.c.b16 %v905, %v897
          %v1082 = vpack.c.b16 %v914, %v906
          %v1083 = vpack.c.b16 %v915, %v907
          %v1084 = vpack.c.b16 %v916, %v908
          %v1085 = vpack.c.b16 %v917, %v909
          %v1086 = vpack.c.b16 %v918, %v910
          %v1087 = vpack.c.b16 %v919, %v911
          %v1088 = vpack.c.b16 %v920, %v912
          %v1089 = vpack.c.b16 %v921, %v913
          %v1090 = vpack.c.b16 %v930, %v922
          %v1091 = vpack.c.b16 %v931, %v923
          %v1092 = vpack.c.b16 %v932, %v924
          %v1093 = vpack.c.b16 %v933, %v925
          %v1094 = vpack.c.b16 %v934, %v926
          %v1095 = vpack.c.b16 %v935, %v927
          %v1096 = vpack.c.b16 %v936, %v928
          %v1097 = vpack.c.b16 %v937, %v929
          %v1098 = vpack.c.b16 %v946, %v938
          %v1099 = vpack.c.b16 %v947, %v939
          %v1100 = vpack.c.b16 %v948, %v940
          %v1101 = vpack.c.b16 %v949, %v941
          %v1102 = vpack.c.b16 %v950, %v942
          %v1103 = vpack.c.b16 %v951, %v943
          %v1104 = vpack.c.b16 %v952, %v944
          %v1105 = vpack.c.b16 %v953, %v945
          %v1106 = vpack.c.b16 %v962, %v954
          %v1107 = vpack.c.b16 %v963, %v955
          %v1108 = vpack.c.b16 %v964, %v956
          %v1109 = vpack.c.b16 %v965, %v957
          %v1110 = vpack.c.b16 %v966, %v958
          %v1111 = vpack.c.b16 %v967, %v959
          %v1112 = vpack.c.b16 %v968, %v960
          %v1113 = vpack.c.b16 %v969, %v961
          %v1114 = vpack.c.b16 %v978, %v970
          %v1115 = vpack.c.b16 %v979, %v971
          %v1116 = vpack.c.b16 %v980, %v972
          %v1117 = vpack.c.b16 %v981, %v973
          %v1118 = vpack.c.b16 %v982, %v974
          %v1119 = vpack.c.b16 %v983, %v975
          %v1120 = vpack.c.b16 %v984, %v976
          %v1121 = vpack.c.b16 %v985, %v977
          %v1122 = vpack.c.b16 %v994, %v986
          %v1123 = vpack.c.b16 %v995, %v987
          %v1124 = vpack.c.b16 %v996, %v988
          %v1125 = vpack.c.b16 %v997, %v989
          %v1126 = vpack.c.b16 %v998, %v990
          %v1127 = vpack.c.b16 %v999, %v991
          %v1128 = vpack.c.b16 %v1000, %v992
          %v1129 = vpack.c.b16 %v1001, %v993
          %1258 = vmatprep.subr.bf16.mxu0 %v1059
          %1259 = vmatpush1.bf16.msra.mxu0 %v1058
          %1260 = vmatprep.subr.bf16.mxu0 %v1051
          %1261 = vmatpush1.bf16.msra.mxu0 %v1050
          %1262 = vmatprep.subr.bf16.mxu0 %v1043
          %1263 = vmatpush1.bf16.msra.mxu0 %v1042
          %1264 = vmatprep.subr.bf16.mxu0 %v1035
          %1265 = vmatpush1.bf16.msra.mxu0 %v1034
          %1266 = vmatprep.subr.bf16.mxu0 %v1027
          %1267 = vmatpush1.bf16.msra.mxu0 %v1026
          %1268 = vmatprep.subr.bf16.mxu0 %v1019
          %1269 = vmatpush1.bf16.msra.mxu0 %v1018
          %1270 = vmatprep.subr.bf16.mxu0 %v1011
          %1271 = vmatpush1.bf16.msra.mxu0 %v1010
          %1272 = vmatprep.subr.bf16.mxu0 %v1003
          %1273 = vmatpush1.bf16.msra.mxu0 %v1002
          %1274 = vmatprep.subr.bf16.mxu0 %v1123
          %1275 = vmatpush2.bf16.msra.mxu0 %v1122
          %1276 = vmatprep.subr.bf16.mxu0 %v1115
          %1277 = vmatpush2.bf16.msra.mxu0 %v1114
          %1278 = vmatprep.subr.bf16.mxu0 %v1107
          %1279 = vmatpush2.bf16.msra.mxu0 %v1106
          %1280 = vmatprep.subr.bf16.mxu0 %v1099
          %1281 = vmatpush2.bf16.msra.mxu0 %v1098
          %1282 = vmatprep.subr.bf16.mxu0 %v1091
          %1283 = vmatpush2.bf16.msra.mxu0 %v1090
          %1284 = vmatprep.subr.bf16.mxu0 %v1083
          %1285 = vmatpush2.bf16.msra.mxu0 %v1082
          %1286 = vmatprep.subr.bf16.mxu0 %v1075
          %1287 = vmatpush2.bf16.msra.mxu0 %v1074
          %1288 = vmatprep.subr.bf16.mxu0 %v1067
          %1289 = vmatpush2.bf16.msra.mxu0 %v1066
          %1290 = vmatprep.mubr.bf16.mxu0 %v615
          %1291 = vmatmul.mubr.bf16.gmra.mxu0 %v614
          %v1292 = vpop.f32.mrf.mxu0
          %v1293 = vadd.f32 %v571, %v1292
          %v1294 = vpop.f32.mrf.mxu0
          %v1295 = vadd.f32 %v575, %v1294
          %v1296 = vpop.f32.mrf.mxu0
          %v1297 = vadd.f32 %v571, %v1296
          %v1298 = vpop.f32.mrf.mxu0
          %v1299 = vadd.f32 %v575, %v1298
          %1300 = vdwg.mxu0
          %1301 = vmatprep.subr.bf16.mxu0 %v1061
          %1302 = vmatpush1.bf16.msra.mxu0 %v1060
          %1303 = vmatprep.subr.bf16.mxu0 %v1053
          %1304 = vmatpush1.bf16.msra.mxu0 %v1052
          %1305 = vmatprep.subr.bf16.mxu0 %v1045
          %1306 = vmatpush1.bf16.msra.mxu0 %v1044
          %1307 = vmatprep.subr.bf16.mxu0 %v1037
          %1308 = vmatpush1.bf16.msra.mxu0 %v1036
          %1309 = vmatprep.subr.bf16.mxu0 %v1029
          %1310 = vmatpush1.bf16.msra.mxu0 %v1028
          %1311 = vmatprep.subr.bf16.mxu0 %v1021
          %1312 = vmatpush1.bf16.msra.mxu0 %v1020
          %1313 = vmatprep.subr.bf16.mxu0 %v1013
          %1314 = vmatpush1.bf16.msra.mxu0 %v1012
          %1315 = vmatprep.subr.bf16.mxu0 %v1005
          %1316 = vmatpush1.bf16.msra.mxu0 %v1004
          %1317 = vmatprep.subr.bf16.mxu0 %v1125
          %1318 = vmatpush2.bf16.msra.mxu0 %v1124
          %1319 = vmatprep.subr.bf16.mxu0 %v1117
          %1320 = vmatpush2.bf16.msra.mxu0 %v1116
          %1321 = vmatprep.subr.bf16.mxu0 %v1109
          %1322 = vmatpush2.bf16.msra.mxu0 %v1108
          %1323 = vmatprep.subr.bf16.mxu0 %v1101
          %1324 = vmatpush2.bf16.msra.mxu0 %v1100
          %1325 = vmatprep.subr.bf16.mxu0 %v1093
          %1326 = vmatpush2.bf16.msra.mxu0 %v1092
          %1327 = vmatprep.subr.bf16.mxu0 %v1085
          %1328 = vmatpush2.bf16.msra.mxu0 %v1084
          %1329 = vmatprep.subr.bf16.mxu0 %v1077
          %1330 = vmatpush2.bf16.msra.mxu0 %v1076
          %1331 = vmatprep.subr.bf16.mxu0 %v1069
          %1332 = vmatpush2.bf16.msra.mxu0 %v1068
          %1333 = vmatprep.mubr.bf16.mxu0 %v615
          %1334 = vmatmul.mubr.bf16.gmra.mxu0 %v614
          %v1335 = vpop.f32.mrf.mxu0
          %v1336 = vadd.f32 %v579, %v1335
          %v1337 = vpop.f32.mrf.mxu0
          %v1338 = vadd.f32 %v583, %v1337
          %v1339 = vpop.f32.mrf.mxu0
          %v1340 = vadd.f32 %v579, %v1339
          %v1341 = vpop.f32.mrf.mxu0
          %v1342 = vadd.f32 %v583, %v1341
          %1343 = vdwg.mxu0
          %1344 = vmatprep.subr.bf16.mxu0 %v1063
          %1345 = vmatpush1.bf16.msra.mxu0 %v1062
          %1346 = vmatprep.subr.bf16.mxu0 %v1055
          %1347 = vmatpush1.bf16.msra.mxu0 %v1054
          %1348 = vmatprep.subr.bf16.mxu0 %v1047
          %1349 = vmatpush1.bf16.msra.mxu0 %v1046
          %1350 = vmatprep.subr.bf16.mxu0 %v1039
          %1351 = vmatpush1.bf16.msra.mxu0 %v1038
          %1352 = vmatprep.subr.bf16.mxu0 %v1031
          %1353 = vmatpush1.bf16.msra.mxu0 %v1030
          %1354 = vmatprep.subr.bf16.mxu0 %v1023
          %1355 = vmatpush1.bf16.msra.mxu0 %v1022
          %1356 = vmatprep.subr.bf16.mxu0 %v1015
          %1357 = vmatpush1.bf16.msra.mxu0 %v1014
          %1358 = vmatprep.subr.bf16.mxu0 %v1007
          %1359 = vmatpush1.bf16.msra.mxu0 %v1006
          %1360 = vmatprep.subr.bf16.mxu0 %v1127
          %1361 = vmatpush2.bf16.msra.mxu0 %v1126
          %1362 = vmatprep.subr.bf16.mxu0 %v1119
          %1363 = vmatpush2.bf16.msra.mxu0 %v1118
          %1364 = vmatprep.subr.bf16.mxu0 %v1111
          %1365 = vmatpush2.bf16.msra.mxu0 %v1110
          %1366 = vmatprep.subr.bf16.mxu0 %v1103
          %1367 = vmatpush2.bf16.msra.mxu0 %v1102
          %1368 = vmatprep.subr.bf16.mxu0 %v1095
          %1369 = vmatpush2.bf16.msra.mxu0 %v1094
          %1370 = vmatprep.subr.bf16.mxu0 %v1087
          %1371 = vmatpush2.bf16.msra.mxu0 %v1086
          %1372 = vmatprep.subr.bf16.mxu0 %v1079
          %1373 = vmatpush2.bf16.msra.mxu0 %v1078
          %1374 = vmatprep.subr.bf16.mxu0 %v1071
          %1375 = vmatpush2.bf16.msra.mxu0 %v1070
          %1376 = vmatprep.mubr.bf16.mxu0 %v615
          %1377 = vmatmul.mubr.bf16.gmra.mxu0 %v614
          %v1378 = vpop.f32.mrf.mxu0
          %v1379 = vadd.f32 %v587, %v1378
          %v1380 = vpop.f32.mrf.mxu0
          %v1381 = vadd.f32 %v591, %v1380
          %v1382 = vpop.f32.mrf.mxu0
          %v1383 = vadd.f32 %v587, %v1382
          %v1384 = vpop.f32.mrf.mxu0
          %v1385 = vadd.f32 %v591, %v1384
          %1386 = vdwg.mxu0
          %1387 = vmatprep.subr.bf16.mxu0 %v1065
          %1388 = vmatpush1.bf16.msra.mxu0 %v1064
          %1389 = vmatprep.subr.bf16.mxu0 %v1057
          %1390 = vmatpush1.bf16.msra.mxu0 %v1056
          %1391 = vmatprep.subr.bf16.mxu0 %v1049
          %1392 = vmatpush1.bf16.msra.mxu0 %v1048
          %1393 = vmatprep.subr.bf16.mxu0 %v1041
          %1394 = vmatpush1.bf16.msra.mxu0 %v1040
          %1395 = vmatprep.subr.bf16.mxu0 %v1033
          %1396 = vmatpush1.bf16.msra.mxu0 %v1032
          %1397 = vmatprep.subr.bf16.mxu0 %v1025
          %1398 = vmatpush1.bf16.msra.mxu0 %v1024
          %1399 = vmatprep.subr.bf16.mxu0 %v1017
          %1400 = vmatpush1.bf16.msra.mxu0 %v1016
          %1401 = vmatprep.subr.bf16.mxu0 %v1009
          %1402 = vmatpush1.bf16.msra.mxu0 %v1008
          %1403 = vmatprep.subr.bf16.mxu0 %v1129
          %1404 = vmatpush2.bf16.msra.mxu0 %v1128
          %1405 = vmatprep.subr.bf16.mxu0 %v1121
          %1406 = vmatpush2.bf16.msra.mxu0 %v1120
          %1407 = vmatprep.subr.bf16.mxu0 %v1113
          %1408 = vmatpush2.bf16.msra.mxu0 %v1112
          %1409 = vmatprep.subr.bf16.mxu0 %v1105
          %1410 = vmatpush2.bf16.msra.mxu0 %v1104
          %1411 = vmatprep.subr.bf16.mxu0 %v1097
          %1412 = vmatpush2.bf16.msra.mxu0 %v1096
          %1413 = vmatprep.subr.bf16.mxu0 %v1089
          %1414 = vmatpush2.bf16.msra.mxu0 %v1088
          %1415 = vmatprep.subr.bf16.mxu0 %v1081
          %1416 = vmatpush2.bf16.msra.mxu0 %v1080
          %1417 = vmatprep.subr.bf16.mxu0 %v1073
          %1418 = vmatpush2.bf16.msra.mxu0 %v1072
          %1419 = vmatprep.mubr.bf16.mxu0 %v615
          %1420 = vmatmul.mubr.bf16.gmra.mxu0 %v614
          %v1421 = vpop.f32.mrf.mxu0
          %v1422 = vadd.f32 %v595, %v1421
          %v1423 = vpop.f32.mrf.mxu0
          %v1424 = vadd.f32 %v599, %v1423
          %v1425 = vpop.f32.mrf.mxu0
          %v1426 = vadd.f32 %v595, %v1425
          %v1427 = vpop.f32.mrf.mxu0
          %v1428 = vadd.f32 %v599, %v1427
          %1429 = vdwg.mxu0
          %v1430 = vmul.f32 %v1293, 0.5
          %v1431 = vmul.f32 %v1295, 0.5
          %v1432 = vmul.f32 %v1336, 0.5
          %v1433 = vmul.f32 %v1338, 0.5
          %v1434 = vmul.f32 %v1379, 0.5
          %v1435 = vmul.f32 %v1381, 0.5
          %v1436 = vmul.f32 %v1422, 0.5
          %v1437 = vmul.f32 %v1424, 0.5
          %v1438 = vmul.f32 %v1297, 0.5
          %v1439 = vmul.f32 %v1299, 0.5
          %v1440 = vmul.f32 %v1340, 0.5
          %v1441 = vmul.f32 %v1342, 0.5
          %v1442 = vmul.f32 %v1383, 0.5
          %v1443 = vmul.f32 %v1385, 0.5
          %v1444 = vmul.f32 %v1426, 0.5
          %v1445 = vmul.f32 %v1428, 0.5
          %v1446 = vtanh.pop %v1430
          %v1447 = vtanh.pop %v1431
          %v1448 = vtanh.pop %v1432
          %v1449 = vtanh.pop %v1433
          %v1450 = vtanh.pop %v1434
          %v1451 = vtanh.pop %v1435
          %v1452 = vtanh.pop %v1436
          %v1453 = vtanh.pop %v1437
          %v1454 = vtanh.pop %v1438
          %v1455 = vtanh.pop %v1439
          %v1456 = vtanh.pop %v1440
          %v1457 = vtanh.pop %v1441
          %v1458 = vtanh.pop %v1442
          %v1459 = vtanh.pop %v1443
          %v1460 = vtanh.pop %v1444
          %v1461 = vtanh.pop %v1445
          %v1462 = vmul.f32 %v1446, 0.5
          %v1463 = vmul.f32 %v1447, 0.5
          %v1464 = vmul.f32 %v1448, 0.5
          %v1465 = vmul.f32 %v1449, 0.5
          %v1466 = vmul.f32 %v1450, 0.5
          %v1467 = vmul.f32 %v1451, 0.5
          %v1468 = vmul.f32 %v1452, 0.5
          %v1469 = vmul.f32 %v1453, 0.5
          %v1470 = vmul.f32 %v1454, 0.5
          %v1471 = vmul.f32 %v1455, 0.5
          %v1472 = vmul.f32 %v1456, 0.5
          %v1473 = vmul.f32 %v1457, 0.5
          %v1474 = vmul.f32 %v1458, 0.5
          %v1475 = vmul.f32 %v1459, 0.5
          %v1476 = vmul.f32 %v1460, 0.5
          %v1477 = vmul.f32 %v1461, 0.5
          %v1478 = vadd.f32 %v1462, 0.5
          %v1479 = vadd.f32 %v1463, 0.5
          %v1480 = vadd.f32 %v1464, 0.5
          %v1481 = vadd.f32 %v1465, 0.5
          %v1482 = vadd.f32 %v1466, 0.5
          %v1483 = vadd.f32 %v1467, 0.5
          %v1484 = vadd.f32 %v1468, 0.5
          %v1485 = vadd.f32 %v1469, 0.5
          %v1486 = vadd.f32 %v1470, 0.5
          %v1487 = vadd.f32 %v1471, 0.5
          %v1488 = vadd.f32 %v1472, 0.5
          %v1489 = vadd.f32 %v1473, 0.5
          %v1490 = vadd.f32 %v1474, 0.5
          %v1491 = vadd.f32 %v1475, 0.5
          %v1492 = vadd.f32 %v1476, 0.5
          %v1493 = vadd.f32 %v1477, 0.5
          %v1494 = vpack.c.bf16 %v1486, %v1478
          %v1495 = vpack.c.bf16 %v1487, %v1479
          %v1496 = vpack.c.bf16 %v1488, %v1480
          %v1497 = vpack.c.bf16 %v1489, %v1481
          %v1498 = vpack.c.bf16 %v1490, %v1482
          %v1499 = vpack.c.bf16 %v1491, %v1483
          %v1500 = vpack.c.bf16 %v1492, %v1484
          %v1501 = vpack.c.bf16 %v1493, %v1485
          %v1510 = vunpack.c.l.b16 %v1494
          %v1511 = vunpack.c.l.b16 %v1495
          %v1512 = vunpack.c.l.b16 %v1496
          %v1513 = vunpack.c.l.b16 %v1497
          %v1514 = vunpack.c.l.b16 %v1498
          %v1515 = vunpack.c.l.b16 %v1499
          %v1516 = vunpack.c.l.b16 %v1500
          %v1517 = vunpack.c.l.b16 %v1501
          %v1518 = vunpack.c.h.b16 %v1494
          %v1519 = vunpack.c.h.b16 %v1495
          %v1520 = vunpack.c.h.b16 %v1496
          %v1521 = vunpack.c.h.b16 %v1497
          %v1522 = vunpack.c.h.b16 %v1498
          %v1523 = vunpack.c.h.b16 %v1499
          %v1524 = vunpack.c.h.b16 %v1500
          %v1525 = vunpack.c.h.b16 %v1501
          %v1526 = vpack.c.b16 %v1511, %v1510
          %v1527 = vpack.c.b16 %v1513, %v1512
          %v1528 = vpack.c.b16 %v1515, %v1514
          %v1529 = vpack.c.b16 %v1517, %v1516
          %v1530 = vpack.c.b16 %v1519, %v1518
          %v1531 = vpack.c.b16 %v1521, %v1520
          %v1532 = vpack.c.b16 %v1523, %v1522
          %v1533 = vpack.c.b16 %v1525, %v1524
          %1542 = vst [vmem:[#allocation2] sm:$0xff] %v1526
          %1543 = vst [vmem:[#allocation2 + $0x8] sm:$0xff] %v1527
          %1544 = vst [vmem:[#allocation2 + $0x10] sm:$0xff] %v1528
          %1545 = vst [vmem:[#allocation2 + $0x18] sm:$0xff] %v1529
          %1546 = vst [vmem:[#allocation2 + $0x20] sm:$0xff] %v1530
          %1547 = vst [vmem:[#allocation2 + $0x28] sm:$0xff] %v1531
          %1548 = vst [vmem:[#allocation2 + $0x30] sm:$0xff] %v1532
          %1549 = vst [vmem:[#allocation2 + $0x38] sm:$0xff] %v1533
          %vm1550 = vcmask 80896
          %1551 = vst.msk [vmem:[#allocation3] sm:$0xff] %vm1550, 0.0
          %1552 = vst.msk [vmem:[#allocation3 + $0x8] sm:$0xff] %vm1550, 0.0
        $region64: #{tpu_custom_call.1} parent=51 // pred_fallthru
          _
        %v1553 = vld [vmem:[%s359] sm:$0xff]
        %v1554 = vld [vmem:[%s359 + $0x8] sm:$0xff]
        %v1555 = vld [vmem:[%s359 + $0x10] sm:$0xff]
        %v1556 = vld [vmem:[%s359 + $0x18] sm:$0xff]
        %v1557 = vld [vmem:[%s359 + $0x20] sm:$0xff]
        %v1558 = vld [vmem:[%s359 + $0x28] sm:$0xff]
        %v1559 = vld [vmem:[%s359 + $0x30] sm:$0xff]
        %v1560 = vld [vmem:[%s359 + $0x38] sm:$0xff]
        %v1561 = vld [vmem:[%s359 + $0x40] sm:$0xff]
        %v1562 = vld [vmem:[%s359 + $0x48] sm:$0xff]
        %v1563 = vld [vmem:[%s359 + $0x50] sm:$0xff]
        %v1564 = vld [vmem:[%s359 + $0x58] sm:$0xff]
        %v1565 = vld [vmem:[%s359 + $0x60] sm:$0xff]
        %v1566 = vld [vmem:[%s359 + $0x68] sm:$0xff]
        %v1567 = vld [vmem:[%s359 + $0x70] sm:$0xff]
        %v1568 = vld [vmem:[%s359 + $0x78] sm:$0xff]
        %v1569 = vld [vmem:[%s359 + $0x80] sm:$0xff]
        %v1570 = vld [vmem:[%s359 + $0x88] sm:$0xff]
        %v1571 = vld [vmem:[%s359 + $0x90] sm:$0xff]
        %v1572 = vld [vmem:[%s359 + $0x98] sm:$0xff]
        %v1573 = vld [vmem:[%s359 + $0xa0] sm:$0xff]
        %v1574 = vld [vmem:[%s359 + $0xa8] sm:$0xff]
        %v1575 = vld [vmem:[%s359 + $0xb0] sm:$0xff]
        %v1576 = vld [vmem:[%s359 + $0xb8] sm:$0xff]
        %v1577 = vld [vmem:[%s359 + $0xc0] sm:$0xff]
        %v1578 = vld [vmem:[%s359 + $0xc8] sm:$0xff]
        %v1579 = vld [vmem:[%s359 + $0xd0] sm:$0xff]
        %v1580 = vld [vmem:[%s359 + $0xd8] sm:$0xff]
        %v1581 = vld [vmem:[%s359 + $0xe0] sm:$0xff]
        %v1582 = vld [vmem:[%s359 + $0xe8] sm:$0xff]
        %v1583 = vld [vmem:[%s359 + $0xf0] sm:$0xff]
        %v1584 = vld [vmem:[%s359 + $0xf8] sm:$0xff]
        %v1585 = vld [vmem:[%s359 + $0x100] sm:$0xff]
        %v1586 = vld [vmem:[%s359 + $0x108] sm:$0xff]
        %v1587 = vld [vmem:[%s359 + $0x110] sm:$0xff]
        %v1588 = vld [vmem:[%s359 + $0x118] sm:$0xff]
        %v1589 = vld [vmem:[%s359 + $0x120] sm:$0xff]
        %v1590 = vld [vmem:[%s359 + $0x128] sm:$0xff]
        %v1591 = vld [vmem:[%s359 + $0x130] sm:$0xff]
        %v1592 = vld [vmem:[%s359 + $0x138] sm:$0xff]
        %v1593 = vld [vmem:[%s359 + $0x140] sm:$0xff]
        %v1594 = vld [vmem:[%s359 + $0x148] sm:$0xff]
        %v1595 = vld [vmem:[%s359 + $0x150] sm:$0xff]
        %v1596 = vld [vmem:[%s359 + $0x158] sm:$0xff]
        %v1597 = vld [vmem:[%s359 + $0x160] sm:$0xff]
        %v1598 = vld [vmem:[%s359 + $0x168] sm:$0xff]
        %v1599 = vld [vmem:[%s359 + $0x170] sm:$0xff]
        %v1600 = vld [vmem:[%s359 + $0x178] sm:$0xff]
        %v1601 = vld [vmem:[%s359 + $0x180] sm:$0xff]
        %v1602 = vld [vmem:[%s359 + $0x188] sm:$0xff]
        %v1603 = vld [vmem:[%s359 + $0x190] sm:$0xff]
        %v1604 = vld [vmem:[%s359 + $0x198] sm:$0xff]
        %v1605 = vld [vmem:[%s359 + $0x1a0] sm:$0xff]
        %v1606 = vld [vmem:[%s359 + $0x1a8] sm:$0xff]
        %v1607 = vld [vmem:[%s359 + $0x1b0] sm:$0xff]
        %v1608 = vld [vmem:[%s359 + $0x1b8] sm:$0xff]
        %v1609 = vld [vmem:[%s359 + $0x1c0] sm:$0xff]
        %v1610 = vld [vmem:[%s359 + $0x1c8] sm:$0xff]
        %v1611 = vld [vmem:[%s359 + $0x1d0] sm:$0xff]
        %v1612 = vld [vmem:[%s359 + $0x1d8] sm:$0xff]
        %v1613 = vld [vmem:[%s359 + $0x1e0] sm:$0xff]
        %v1614 = vld [vmem:[%s359 + $0x1e8] sm:$0xff]
        %v1615 = vld [vmem:[%s359 + $0x1f0] sm:$0xff]
        %v1616 = vld [vmem:[%s359 + $0x1f8] sm:$0xff]
        %v1617 = vunpack.c.0.s8 %v1553
        %v1618 = vunpack.c.0.s8 %v1554
        %v1619 = vunpack.c.1.s8 %v1553
        %v1620 = vunpack.c.1.s8 %v1554
        %v1621 = vunpack.c.2.s8 %v1553
        %v1622 = vunpack.c.2.s8 %v1554
        %v1623 = vunpack.c.3.s8 %v1553
        %v1624 = vunpack.c.3.s8 %v1554
        %v1625 = vunpack.c.0.s8 %v1555
        %v1626 = vunpack.c.0.s8 %v1556
        %v1627 = vunpack.c.1.s8 %v1555
        %v1628 = vunpack.c.1.s8 %v1556
        %v1629 = vunpack.c.2.s8 %v1555
        %v1630 = vunpack.c.2.s8 %v1556
        %v1631 = vunpack.c.3.s8 %v1555
        %v1632 = vunpack.c.3.s8 %v1556
        %v1633 = vunpack.c.0.s8 %v1557
        %v1634 = vunpack.c.0.s8 %v1558
        %v1635 = vunpack.c.1.s8 %v1557
        %v1636 = vunpack.c.1.s8 %v1558
        %v1637 = vunpack.c.2.s8 %v1557
        %v1638 = vunpack.c.2.s8 %v1558
        %v1639 = vunpack.c.3.s8 %v1557
        %v1640 = vunpack.c.3.s8 %v1558
        %v1641 = vunpack.c.0.s8 %v1559
        %v1642 = vunpack.c.0.s8 %v1560
        %v1643 = vunpack.c.1.s8 %v1559
        %v1644 = vunpack.c.1.s8 %v1560
        %v1645 = vunpack.c.2.s8 %v1559
        %v1646 = vunpack.c.2.s8 %v1560
        %v1647 = vunpack.c.3.s8 %v1559
        %v1648 = vunpack.c.3.s8 %v1560
        %v1649 = vunpack.c.0.s8 %v1561
        %v1650 = vunpack.c.0.s8 %v1562
        %v1651 = vunpack.c.1.s8 %v1561
        %v1652 = vunpack.c.1.s8 %v1562
        %v1653 = vunpack.c.2.s8 %v1561
        %v1654 = vunpack.c.2.s8 %v1562
        %v1655 = vunpack.c.3.s8 %v1561
        %v1656 = vunpack.c.3.s8 %v1562
        %v1657 = vunpack.c.0.s8 %v1563
        %v1658 = vunpack.c.0.s8 %v1564
        %v1659 = vunpack.c.1.s8 %v1563
        %v1660 = vunpack.c.1.s8 %v1564
        %v1661 = vunpack.c.2.s8 %v1563
        %v1662 = vunpack.c.2.s8 %v1564
        %v1663 = vunpack.c.3.s8 %v1563
        %v1664 = vunpack.c.3.s8 %v1564
        %v1665 = vunpack.c.0.s8 %v1565
        %v1666 = vunpack.c.0.s8 %v1566
        %v1667 = vunpack.c.1.s8 %v1565
        %v1668 = vunpack.c.1.s8 %v1566
        %v1669 = vunpack.c.2.s8 %v1565
        %v1670 = vunpack.c.2.s8 %v1566
        %v1671 = vunpack.c.3.s8 %v1565
        %v1672 = vunpack.c.3.s8 %v1566
        %v1673 = vunpack.c.0.s8 %v1567
        %v1674 = vunpack.c.0.s8 %v1568
        %v1675 = vunpack.c.1.s8 %v1567
        %v1676 = vunpack.c.1.s8 %v1568
        %v1677 = vunpack.c.2.s8 %v1567
        %v1678 = vunpack.c.2.s8 %v1568
        %v1679 = vunpack.c.3.s8 %v1567
        %v1680 = vunpack.c.3.s8 %v1568
        %v1681 = vunpack.c.0.s8 %v1569
        %v1682 = vunpack.c.0.s8 %v1570
        %v1683 = vunpack.c.1.s8 %v1569
        %v1684 = vunpack.c.1.s8 %v1570
        %v1685 = vunpack.c.2.s8 %v1569
        %v1686 = vunpack.c.2.s8 %v1570
        %v1687 = vunpack.c.3.s8 %v1569
        %v1688 = vunpack.c.3.s8 %v1570
        %v1689 = vunpack.c.0.s8 %v1571
        %v1690 = vunpack.c.0.s8 %v1572
        %v1691 = vunpack.c.1.s8 %v1571
        %v1692 = vunpack.c.1.s8 %v1572
        %v1693 = vunpack.c.2.s8 %v1571
        %v1694 = vunpack.c.2.s8 %v1572
        %v1695 = vunpack.c.3.s8 %v1571
        %v1696 = vunpack.c.3.s8 %v1572
        %v1697 = vunpack.c.0.s8 %v1573
        %v1698 = vunpack.c.0.s8 %v1574
        %v1699 = vunpack.c.1.s8 %v1573
        %v1700 = vunpack.c.1.s8 %v1574
        %v1701 = vunpack.c.2.s8 %v1573
        %v1702 = vunpack.c.2.s8 %v1574
        %v1703 = vunpack.c.3.s8 %v1573
        %v1704 = vunpack.c.3.s8 %v1574
        %v1705 = vunpack.c.0.s8 %v1575
        %v1706 = vunpack.c.0.s8 %v1576
        %v1707 = vunpack.c.1.s8 %v1575
        %v1708 = vunpack.c.1.s8 %v1576
        %v1709 = vunpack.c.2.s8 %v1575
        %v1710 = vunpack.c.2.s8 %v1576
        %v1711 = vunpack.c.3.s8 %v1575
        %v1712 = vunpack.c.3.s8 %v1576
        %v1713 = vunpack.c.0.s8 %v1577
        %v1714 = vunpack.c.0.s8 %v1578
        %v1715 = vunpack.c.1.s8 %v1577
        %v1716 = vunpack.c.1.s8 %v1578
        %v1717 = vunpack.c.2.s8 %v1577
        %v1718 = vunpack.c.2.s8 %v1578
        %v1719 = vunpack.c.3.s8 %v1577
        %v1720 = vunpack.c.3.s8 %v1578
        %v1721 = vunpack.c.0.s8 %v1579
        %v1722 = vunpack.c.0.s8 %v1580
        %v1723 = vunpack.c.1.s8 %v1579
        %v1724 = vunpack.c.1.s8 %v1580
        %v1725 = vunpack.c.2.s8 %v1579
        %v1726 = vunpack.c.2.s8 %v1580
        %v1727 = vunpack.c.3.s8 %v1579
        %v1728 = vunpack.c.3.s8 %v1580
        %v1729 = vunpack.c.0.s8 %v1581
        %v1730 = vunpack.c.0.s8 %v1582
        %v1731 = vunpack.c.1.s8 %v1581
        %v1732 = vunpack.c.1.s8 %v1582
        %v1733 = vunpack.c.2.s8 %v1581
        %v1734 = vunpack.c.2.s8 %v1582
        %v1735 = vunpack.c.3.s8 %v1581
        %v1736 = vunpack.c.3.s8 %v1582
        %v1737 = vunpack.c.0.s8 %v1583
        %v1738 = vunpack.c.0.s8 %v1584
        %v1739 = vunpack.c.1.s8 %v1583
        %v1740 = vunpack.c.1.s8 %v1584
        %v1741 = vunpack.c.2.s8 %v1583
        %v1742 = vunpack.c.2.s8 %v1584
        %v1743 = vunpack.c.3.s8 %v1583
        %v1744 = vunpack.c.3.s8 %v1584
        %v1745 = vunpack.c.0.s8 %v1585
        %v1746 = vunpack.c.0.s8 %v1586
        %v1747 = vunpack.c.1.s8 %v1585
        %v1748 = vunpack.c.1.s8 %v1586
        %v1749 = vunpack.c.2.s8 %v1585
        %v1750 = vunpack.c.2.s8 %v1586
        %v1751 = vunpack.c.3.s8 %v1585
        %v1752 = vunpack.c.3.s8 %v1586
        %v1753 = vunpack.c.0.s8 %v1587
        %v1754 = vunpack.c.0.s8 %v1588
        %v1755 = vunpack.c.1.s8 %v1587
        %v1756 = vunpack.c.1.s8 %v1588
        %v1757 = vunpack.c.2.s8 %v1587
        %v1758 = vunpack.c.2.s8 %v1588
        %v1759 = vunpack.c.3.s8 %v1587
        %v1760 = vunpack.c.3.s8 %v1588
        %v1761 = vunpack.c.0.s8 %v1589
        %v1762 = vunpack.c.0.s8 %v1590
        %v1763 = vunpack.c.1.s8 %v1589
        %v1764 = vunpack.c.1.s8 %v1590
        %v1765 = vunpack.c.2.s8 %v1589
        %v1766 = vunpack.c.2.s8 %v1590
        %v1767 = vunpack.c.3.s8 %v1589
        %v1768 = vunpack.c.3.s8 %v1590
        %v1769 = vunpack.c.0.s8 %v1591
        %v1770 = vunpack.c.0.s8 %v1592
        %v1771 = vunpack.c.1.s8 %v1591
        %v1772 = vunpack.c.1.s8 %v1592
        %v1773 = vunpack.c.2.s8 %v1591
        %v1774 = vunpack.c.2.s8 %v1592
        %v1775 = vunpack.c.3.s8 %v1591
        %v1776 = vunpack.c.3.s8 %v1592
        %v1777 = vunpack.c.0.s8 %v1593
        %v1778 = vunpack.c.0.s8 %v1594
        %v1779 = vunpack.c.1.s8 %v1593
        %v1780 = vunpack.c.1.s8 %v1594
        %v1781 = vunpack.c.2.s8 %v1593
        %v1782 = vunpack.c.2.s8 %v1594
        %v1783 = vunpack.c.3.s8 %v1593
        %v1784 = vunpack.c.3.s8 %v1594
        %v1785 = vunpack.c.0.s8 %v1595
        %v1786 = vunpack.c.0.s8 %v1596
        %v1787 = vunpack.c.1.s8 %v1595
        %v1788 = vunpack.c.1.s8 %v1596
        %v1789 = vunpack.c.2.s8 %v1595
        %v1790 = vunpack.c.2.s8 %v1596
        %v1791 = vunpack.c.3.s8 %v1595
        %v1792 = vunpack.c.3.s8 %v1596
        %v1793 = vunpack.c.0.s8 %v1597
        %v1794 = vunpack.c.0.s8 %v1598
        %v1795 = vunpack.c.1.s8 %v1597
        %v1796 = vunpack.c.1.s8 %v1598
        %v1797 = vunpack.c.2.s8 %v1597
        %v1798 = vunpack.c.2.s8 %v1598
        %v1799 = vunpack.c.3.s8 %v1597
        %v1800 = vunpack.c.3.s8 %v1598
        %v1801 = vunpack.c.0.s8 %v1599
        %v1802 = vunpack.c.0.s8 %v1600
        %v1803 = vunpack.c.1.s8 %v1599
        %v1804 = vunpack.c.1.s8 %v1600
        %v1805 = vunpack.c.2.s8 %v1599
        %v1806 = vunpack.c.2.s8 %v1600
        %v1807 = vunpack.c.3.s8 %v1599
        %v1808 = vunpack.c.3.s8 %v1600
        %v1809 = vunpack.c.0.s8 %v1601
        %v1810 = vunpack.c.0.s8 %v1602
        %v1811 = vunpack.c.1.s8 %v1601
        %v1812 = vunpack.c.1.s8 %v1602
        %v1813 = vunpack.c.2.s8 %v1601
        %v1814 = vunpack.c.2.s8 %v1602
        %v1815 = vunpack.c.3.s8 %v1601
        %v1816 = vunpack.c.3.s8 %v1602
        %v1817 = vunpack.c.0.s8 %v1603
        %v1818 = vunpack.c.0.s8 %v1604
        %v1819 = vunpack.c.1.s8 %v1603
        %v1820 = vunpack.c.1.s8 %v1604
        %v1821 = vunpack.c.2.s8 %v1603
        %v1822 = vunpack.c.2.s8 %v1604
        %v1823 = vunpack.c.3.s8 %v1603
        %v1824 = vunpack.c.3.s8 %v1604
        %v1825 = vunpack.c.0.s8 %v1605
        %v1826 = vunpack.c.0.s8 %v1606
        %v1827 = vunpack.c.1.s8 %v1605
        %v1828 = vunpack.c.1.s8 %v1606
        %v1829 = vunpack.c.2.s8 %v1605
        %v1830 = vunpack.c.2.s8 %v1606
        %v1831 = vunpack.c.3.s8 %v1605
        %v1832 = vunpack.c.3.s8 %v1606
        %v1833 = vunpack.c.0.s8 %v1607
        %v1834 = vunpack.c.0.s8 %v1608
        %v1835 = vunpack.c.1.s8 %v1607
        %v1836 = vunpack.c.1.s8 %v1608
        %v1837 = vunpack.c.2.s8 %v1607
        %v1838 = vunpack.c.2.s8 %v1608
        %v1839 = vunpack.c.3.s8 %v1607
        %v1840 = vunpack.c.3.s8 %v1608
        %v1841 = vunpack.c.0.s8 %v1609
        %v1842 = vunpack.c.0.s8 %v1610
        %v1843 = vunpack.c.1.s8 %v1609
        %v1844 = vunpack.c.1.s8 %v1610
        %v1845 = vunpack.c.2.s8 %v1609
        %v1846 = vunpack.c.2.s8 %v1610
        %v1847 = vunpack.c.3.s8 %v1609
        %v1848 = vunpack.c.3.s8 %v1610
        %v1849 = vunpack.c.0.s8 %v1611
        %v1850 = vunpack.c.0.s8 %v1612
        %v1851 = vunpack.c.1.s8 %v1611
        %v1852 = vunpack.c.1.s8 %v1612
        %v1853 = vunpack.c.2.s8 %v1611
        %v1854 = vunpack.c.2.s8 %v1612
        %v1855 = vunpack.c.3.s8 %v1611
        %v1856 = vunpack.c.3.s8 %v1612
        %v1857 = vunpack.c.0.s8 %v1613
        %v1858 = vunpack.c.0.s8 %v1614
        %v1859 = vunpack.c.1.s8 %v1613
        %v1860 = vunpack.c.1.s8 %v1614
        %v1861 = vunpack.c.2.s8 %v1613
        %v1862 = vunpack.c.2.s8 %v1614
        %v1863 = vunpack.c.3.s8 %v1613
        %v1864 = vunpack.c.3.s8 %v1614
        %v1865 = vunpack.c.0.s8 %v1615
        %v1866 = vunpack.c.0.s8 %v1616
        %v1867 = vunpack.c.1.s8 %v1615
        %v1868 = vunpack.c.1.s8 %v1616
        %v1869 = vunpack.c.2.s8 %v1615
        %v1870 = vunpack.c.2.s8 %v1616
        %v1871 = vunpack.c.3.s8 %v1615
        %v1872 = vunpack.c.3.s8 %v1616
        %v1873 = vcvt.s32.f32 %v1617
        %v1874 = vcvt.s32.f32 %v1618
        %v1875 = vcvt.s32.f32 %v1619
        %v1876 = vcvt.s32.f32 %v1620
        %v1877 = vcvt.s32.f32 %v1621
        %v1878 = vcvt.s32.f32 %v1622
        %v1879 = vcvt.s32.f32 %v1623
        %v1880 = vcvt.s32.f32 %v1624
        %v1881 = vcvt.s32.f32 %v1625
        %v1882 = vcvt.s32.f32 %v1626
        %v1883 = vcvt.s32.f32 %v1627
        %v1884 = vcvt.s32.f32 %v1628
        %v1885 = vcvt.s32.f32 %v1629
        %v1886 = vcvt.s32.f32 %v1630
        %v1887 = vcvt.s32.f32 %v1631
        %v1888 = vcvt.s32.f32 %v1632
        %v1889 = vcvt.s32.f32 %v1633
        %v1890 = vcvt.s32.f32 %v1634
        %v1891 = vcvt.s32.f32 %v1635
        %v1892 = vcvt.s32.f32 %v1636
        %v1893 = vcvt.s32.f32 %v1637
        %v1894 = vcvt.s32.f32 %v1638
        %v1895 = vcvt.s32.f32 %v1639
        %v1896 = vcvt.s32.f32 %v1640
        %v1897 = vcvt.s32.f32 %v1641
        %v1898 = vcvt.s32.f32 %v1642
        %v1899 = vcvt.s32.f32 %v1643
        %v1900 = vcvt.s32.f32 %v1644
        %v1901 = vcvt.s32.f32 %v1645
        %v1902 = vcvt.s32.f32 %v1646
        %v1903 = vcvt.s32.f32 %v1647
        %v1904 = vcvt.s32.f32 %v1648
        %v1905 = vcvt.s32.f32 %v1649
        %v1906 = vcvt.s32.f32 %v1650
        %v1907 = vcvt.s32.f32 %v1651
        %v1908 = vcvt.s32.f32 %v1652
        %v1909 = vcvt.s32.f32 %v1653
        %v1910 = vcvt.s32.f32 %v1654
        %v1911 = vcvt.s32.f32 %v1655
        %v1912 = vcvt.s32.f32 %v1656
        %v1913 = vcvt.s32.f32 %v1657
        %v1914 = vcvt.s32.f32 %v1658
        %v1915 = vcvt.s32.f32 %v1659
        %v1916 = vcvt.s32.f32 %v1660
        %v1917 = vcvt.s32.f32 %v1661
        %v1918 = vcvt.s32.f32 %v1662
        %v1919 = vcvt.s32.f32 %v1663
        %v1920 = vcvt.s32.f32 %v1664
        %v1921 = vcvt.s32.f32 %v1665
        %v1922 = vcvt.s32.f32 %v1666
        %v1923 = vcvt.s32.f32 %v1667
        %v1924 = vcvt.s32.f32 %v1668
        %v1925 = vcvt.s32.f32 %v1669
        %v1926 = vcvt.s32.f32 %v1670
        %v1927 = vcvt.s32.f32 %v1671
        %v1928 = vcvt.s32.f32 %v1672
        %v1929 = vcvt.s32.f32 %v1673
        %v1930 = vcvt.s32.f32 %v1674
        %v1931 = vcvt.s32.f32 %v1675
        %v1932 = vcvt.s32.f32 %v1676
        %v1933 = vcvt.s32.f32 %v1677
        %v1934 = vcvt.s32.f32 %v1678
        %v1935 = vcvt.s32.f32 %v1679
        %v1936 = vcvt.s32.f32 %v1680
        %v1937 = vcvt.s32.f32 %v1681
        %v1938 = vcvt.s32.f32 %v1682
        %v1939 = vcvt.s32.f32 %v1683
        %v1940 = vcvt.s32.f32 %v1684
        %v1941 = vcvt.s32.f32 %v1685
        %v1942 = vcvt.s32.f32 %v1686
        %v1943 = vcvt.s32.f32 %v1687
        %v1944 = vcvt.s32.f32 %v1688
        %v1945 = vcvt.s32.f32 %v1689
        %v1946 = vcvt.s32.f32 %v1690
        %v1947 = vcvt.s32.f32 %v1691
        %v1948 = vcvt.s32.f32 %v1692
        %v1949 = vcvt.s32.f32 %v1693
        %v1950 = vcvt.s32.f32 %v1694
        %v1951 = vcvt.s32.f32 %v1695
        %v1952 = vcvt.s32.f32 %v1696
        %v1953 = vcvt.s32.f32 %v1697
        %v1954 = vcvt.s32.f32 %v1698
        %v1955 = vcvt.s32.f32 %v1699
        %v1956 = vcvt.s32.f32 %v1700
        %v1957 = vcvt.s32.f32 %v1701
        %v1958 = vcvt.s32.f32 %v1702
        %v1959 = vcvt.s32.f32 %v1703
        %v1960 = vcvt.s32.f32 %v1704
        %v1961 = vcvt.s32.f32 %v1705
        %v1962 = vcvt.s32.f32 %v1706
        %v1963 = vcvt.s32.f32 %v1707
        %v1964 = vcvt.s32.f32 %v1708
        %v1965 = vcvt.s32.f32 %v1709
        %v1966 = vcvt.s32.f32 %v1710
        %v1967 = vcvt.s32.f32 %v1711
        %v1968 = vcvt.s32.f32 %v1712
        %v1969 = vcvt.s32.f32 %v1713
        %v1970 = vcvt.s32.f32 %v1714
        %v1971 = vcvt.s32.f32 %v1715
        %v1972 = vcvt.s32.f32 %v1716
        %v1973 = vcvt.s32.f32 %v1717
        %v1974 = vcvt.s32.f32 %v1718
        %v1975 = vcvt.s32.f32 %v1719
        %v1976 = vcvt.s32.f32 %v1720
        %v1977 = vcvt.s32.f32 %v1721
        %v1978 = vcvt.s32.f32 %v1722
        %v1979 = vcvt.s32.f32 %v1723
        %v1980 = vcvt.s32.f32 %v1724
        %v1981 = vcvt.s32.f32 %v1725
        %v1982 = vcvt.s32.f32 %v1726
        %v1983 = vcvt.s32.f32 %v1727
        %v1984 = vcvt.s32.f32 %v1728
        %v1985 = vcvt.s32.f32 %v1729
        %v1986 = vcvt.s32.f32 %v1730
        %v1987 = vcvt.s32.f32 %v1731
        %v1988 = vcvt.s32.f32 %v1732
        %v1989 = vcvt.s32.f32 %v1733
        %v1990 = vcvt.s32.f32 %v1734
        %v1991 = vcvt.s32.f32 %v1735
        %v1992 = vcvt.s32.f32 %v1736
        %v1993 = vcvt.s32.f32 %v1737
        %v1994 = vcvt.s32.f32 %v1738
        %v1995 = vcvt.s32.f32 %v1739
        %v1996 = vcvt.s32.f32 %v1740
        %v1997 = vcvt.s32.f32 %v1741
        %v1998 = vcvt.s32.f32 %v1742
        %v1999 = vcvt.s32.f32 %v1743
        %v2000 = vcvt.s32.f32 %v1744
        %v2001 = vcvt.s32.f32 %v1745
        %v2002 = vcvt.s32.f32 %v1746
        %v2003 = vcvt.s32.f32 %v1747
        %v2004 = vcvt.s32.f32 %v1748
        %v2005 = vcvt.s32.f32 %v1749
        %v2006 = vcvt.s32.f32 %v1750
        %v2007 = vcvt.s32.f32 %v1751
        %v2008 = vcvt.s32.f32 %v1752
        %v2009 = vcvt.s32.f32 %v1753
        %v2010 = vcvt.s32.f32 %v1754
        %v2011 = vcvt.s32.f32 %v1755
        %v2012 = vcvt.s32.f32 %v1756
        %v2013 = vcvt.s32.f32 %v1757
        %v2014 = vcvt.s32.f32 %v1758
        %v2015 = vcvt.s32.f32 %v1759
        %v2016 = vcvt.s32.f32 %v1760
        %v2017 = vcvt.s32.f32 %v1761
        %v2018 = vcvt.s32.f32 %v1762
        %v2019 = vcvt.s32.f32 %v1763
        %v2020 = vcvt.s32.f32 %v1764
        %v2021 = vcvt.s32.f32 %v1765
        %v2022 = vcvt.s32.f32 %v1766
        %v2023 = vcvt.s32.f32 %v1767
        %v2024 = vcvt.s32.f32 %v1768
        %v2025 = vcvt.s32.f32 %v1769
        %v2026 = vcvt.s32.f32 %v1770
        %v2027 = vcvt.s32.f32 %v1771
        %v2028 = vcvt.s32.f32 %v1772
        %v2029 = vcvt.s32.f32 %v1773
        %v2030 = vcvt.s32.f32 %v1774
        %v2031 = vcvt.s32.f32 %v1775
        %v2032 = vcvt.s32.f32 %v1776
        %v2033 = vcvt.s32.f32 %v1777
        %v2034 = vcvt.s32.f32 %v1778
        %v2035 = vcvt.s32.f32 %v1779
        %v2036 = vcvt.s32.f32 %v1780
        %v2037 = vcvt.s32.f32 %v1781
        %v2038 = vcvt.s32.f32 %v1782
        %v2039 = vcvt.s32.f32 %v1783
        %v2040 = vcvt.s32.f32 %v1784
        %v2041 = vcvt.s32.f32 %v1785
        %v2042 = vcvt.s32.f32 %v1786
        %v2043 = vcvt.s32.f32 %v1787
        %v2044 = vcvt.s32.f32 %v1788
        %v2045 = vcvt.s32.f32 %v1789
        %v2046 = vcvt.s32.f32 %v1790
        %v2047 = vcvt.s32.f32 %v1791
        %v2048 = vcvt.s32.f32 %v1792
        %v2049 = vcvt.s32.f32 %v1793
        %v2050 = vcvt.s32.f32 %v1794
        %v2051 = vcvt.s32.f32 %v1795
        %v2052 = vcvt.s32.f32 %v1796
        %v2053 = vcvt.s32.f32 %v1797
        %v2054 = vcvt.s32.f32 %v1798
        %v2055 = vcvt.s32.f32 %v1799
        %v2056 = vcvt.s32.f32 %v1800
        %v2057 = vcvt.s32.f32 %v1801
        %v2058 = vcvt.s32.f32 %v1802
        %v2059 = vcvt.s32.f32 %v1803
        %v2060 = vcvt.s32.f32 %v1804
        %v2061 = vcvt.s32.f32 %v1805
        %v2062 = vcvt.s32.f32 %v1806
        %v2063 = vcvt.s32.f32 %v1807
        %v2064 = vcvt.s32.f32 %v1808
        %v2065 = vcvt.s32.f32 %v1809
        %v2066 = vcvt.s32.f32 %v1810
        %v2067 = vcvt.s32.f32 %v1811
        %v2068 = vcvt.s32.f32 %v1812
        %v2069 = vcvt.s32.f32 %v1813
        %v2070 = vcvt.s32.f32 %v1814
        %v2071 = vcvt.s32.f32 %v1815
        %v2072 = vcvt.s32.f32 %v1816
        %v2073 = vcvt.s32.f32 %v1817
        %v2074 = vcvt.s32.f32 %v1818
        %v2075 = vcvt.s32.f32 %v1819
        %v2076 = vcvt.s32.f32 %v1820
        %v2077 = vcvt.s32.f32 %v1821
        %v2078 = vcvt.s32.f32 %v1822
        %v2079 = vcvt.s32.f32 %v1823
        %v2080 = vcvt.s32.f32 %v1824
        %v2081 = vcvt.s32.f32 %v1825
        %v2082 = vcvt.s32.f32 %v1826
        %v2083 = vcvt.s32.f32 %v1827
        %v2084 = vcvt.s32.f32 %v1828
        %v2085 = vcvt.s32.f32 %v1829
        %v2086 = vcvt.s32.f32 %v1830
        %v2087 = vcvt.s32.f32 %v1831
        %v2088 = vcvt.s32.f32 %v1832
        %v2089 = vcvt.s32.f32 %v1833
        %v2090 = vcvt.s32.f32 %v1834
        %v2091 = vcvt.s32.f32 %v1835
        %v2092 = vcvt.s32.f32 %v1836
        %v2093 = vcvt.s32.f32 %v1837
        %v2094 = vcvt.s32.f32 %v1838
        %v2095 = vcvt.s32.f32 %v1839
        %v2096 = vcvt.s32.f32 %v1840
        %v2097 = vcvt.s32.f32 %v1841
        %v2098 = vcvt.s32.f32 %v1842
        %v2099 = vcvt.s32.f32 %v1843
        %v2100 = vcvt.s32.f32 %v1844
        %v2101 = vcvt.s32.f32 %v1845
        %v2102 = vcvt.s32.f32 %v1846
        %v2103 = vcvt.s32.f32 %v1847
        %v2104 = vcvt.s32.f32 %v1848
        %v2105 = vcvt.s32.f32 %v1849
        %v2106 = vcvt.s32.f32 %v1850
        %v2107 = vcvt.s32.f32 %v1851
        %v2108 = vcvt.s32.f32 %v1852
        %v2109 = vcvt.s32.f32 %v1853
        %v2110 = vcvt.s32.f32 %v1854
        %v2111 = vcvt.s32.f32 %v1855
        %v2112 = vcvt.s32.f32 %v1856
        %v2113 = vcvt.s32.f32 %v1857
        %v2114 = vcvt.s32.f32 %v1858
        %v2115 = vcvt.s32.f32 %v1859
        %v2116 = vcvt.s32.f32 %v1860
        %v2117 = vcvt.s32.f32 %v1861
        %v2118 = vcvt.s32.f32 %v1862
        %v2119 = vcvt.s32.f32 %v1863
        %v2120 = vcvt.s32.f32 %v1864
        %v2121 = vcvt.s32.f32 %v1865
        %v2122 = vcvt.s32.f32 %v1866
        %v2123 = vcvt.s32.f32 %v1867
        %v2124 = vcvt.s32.f32 %v1868
        %v2125 = vcvt.s32.f32 %v1869
        %v2126 = vcvt.s32.f32 %v1870
        %v2127 = vcvt.s32.f32 %v1871
        %v2128 = vcvt.s32.f32 %v1872
        %v2129 = vld [vmem:[%s417] sm:$0x3]
        %v2131 = vlaneseq
        %v2132 = vshrl.u32 %v2131, 7
        %v2133 = vsub.s32 0, %v2132
        %v2134 = vrot.slane %v2129, %v2133
        %v2135 = vlaneseq
        %v2136 = vshrl.u32 %v2135, 7
        %v2137 = vsub.s32 1, %v2136
        %v2138 = vrot.slane %v2129, %v2137
        %v2141 = vmul.f32 %v1873, %v2134
        %v2142 = vmul.f32 %v1874, %v2138
        %v2143 = vmul.f32 %v1875, %v2134
        %v2144 = vmul.f32 %v1876, %v2138
        %v2145 = vmul.f32 %v1877, %v2134
        %v2146 = vmul.f32 %v1878, %v2138
        %v2147 = vmul.f32 %v1879, %v2134
        %v2148 = vmul.f32 %v1880, %v2138
        %v2149 = vmul.f32 %v1881, %v2134
        %v2150 = vmul.f32 %v1882, %v2138
        %v2151 = vmul.f32 %v1883, %v2134
        %v2152 = vmul.f32 %v1884, %v2138
        %v2153 = vmul.f32 %v1885, %v2134
        %v2154 = vmul.f32 %v1886, %v2138
        %v2155 = vmul.f32 %v1887, %v2134
        %v2156 = vmul.f32 %v1888, %v2138
        %v2157 = vmul.f32 %v1889, %v2134
        %v2158 = vmul.f32 %v1890, %v2138
        %v2159 = vmul.f32 %v1891, %v2134
        %v2160 = vmul.f32 %v1892, %v2138
        %v2161 = vmul.f32 %v1893, %v2134
        %v2162 = vmul.f32 %v1894, %v2138
        %v2163 = vmul.f32 %v1895, %v2134
        %v2164 = vmul.f32 %v1896, %v2138
        %v2165 = vmul.f32 %v1897, %v2134
        %v2166 = vmul.f32 %v1898, %v2138
        %v2167 = vmul.f32 %v1899, %v2134
        %v2168 = vmul.f32 %v1900, %v2138
        %v2169 = vmul.f32 %v1901, %v2134
        %v2170 = vmul.f32 %v1902, %v2138
        %v2171 = vmul.f32 %v1903, %v2134
        %v2172 = vmul.f32 %v1904, %v2138
        %v2173 = vmul.f32 %v1905, %v2134
        %v2174 = vmul.f32 %v1906, %v2138
        %v2175 = vmul.f32 %v1907, %v2134
        %v2176 = vmul.f32 %v1908, %v2138
        %v2177 = vmul.f32 %v1909, %v2134
        %v2178 = vmul.f32 %v1910, %v2138
        %v2179 = vmul.f32 %v1911, %v2134
        %v2180 = vmul.f32 %v1912, %v2138
        %v2181 = vmul.f32 %v1913, %v2134
        %v2182 = vmul.f32 %v1914, %v2138
        %v2183 = vmul.f32 %v1915, %v2134
        %v2184 = vmul.f32 %v1916, %v2138
        %v2185 = vmul.f32 %v1917, %v2134
        %v2186 = vmul.f32 %v1918, %v2138
        %v2187 = vmul.f32 %v1919, %v2134
        %v2188 = vmul.f32 %v1920, %v2138
        %v2189 = vmul.f32 %v1921, %v2134
        %v2190 = vmul.f32 %v1922, %v2138
        %v2191 = vmul.f32 %v1923, %v2134
        %v2192 = vmul.f32 %v1924, %v2138
        %v2193 = vmul.f32 %v1925, %v2134
        %v2194 = vmul.f32 %v1926, %v2138
        %v2195 = vmul.f32 %v1927, %v2134
        %v2196 = vmul.f32 %v1928, %v2138
        %v2197 = vmul.f32 %v1929, %v2134
        %v2198 = vmul.f32 %v1930, %v2138
        %v2199 = vmul.f32 %v1931, %v2134
        %v2200 = vmul.f32 %v1932, %v2138
        %v2201 = vmul.f32 %v1933, %v2134
        %v2202 = vmul.f32 %v1934, %v2138
        %v2203 = vmul.f32 %v1935, %v2134
        %v2204 = vmul.f32 %v1936, %v2138
        %v2205 = vmul.f32 %v1937, %v2134
        %v2206 = vmul.f32 %v1938, %v2138
        %v2207 = vmul.f32 %v1939, %v2134
        %v2208 = vmul.f32 %v1940, %v2138
        %v2209 = vmul.f32 %v1941, %v2134
        %v2210 = vmul.f32 %v1942, %v2138
        %v2211 = vmul.f32 %v1943, %v2134
        %v2212 = vmul.f32 %v1944, %v2138
        %v2213 = vmul.f32 %v1945, %v2134
        %v2214 = vmul.f32 %v1946, %v2138
        %v2215 = vmul.f32 %v1947, %v2134
        %v2216 = vmul.f32 %v1948, %v2138
        %v2217 = vmul.f32 %v1949, %v2134
        %v2218 = vmul.f32 %v1950, %v2138
        %v2219 = vmul.f32 %v1951, %v2134
        %v2220 = vmul.f32 %v1952, %v2138
        %v2221 = vmul.f32 %v1953, %v2134
        %v2222 = vmul.f32 %v1954, %v2138
        %v2223 = vmul.f32 %v1955, %v2134
        %v2224 = vmul.f32 %v1956, %v2138
        %v2225 = vmul.f32 %v1957, %v2134
        %v2226 = vmul.f32 %v1958, %v2138
        %v2227 = vmul.f32 %v1959, %v2134
        %v2228 = vmul.f32 %v1960, %v2138
        %v2229 = vmul.f32 %v1961, %v2134
        %v2230 = vmul.f32 %v1962, %v2138
        %v2231 = vmul.f32 %v1963, %v2134
        %v2232 = vmul.f32 %v1964, %v2138
        %v2233 = vmul.f32 %v1965, %v2134
        %v2234 = vmul.f32 %v1966, %v2138
        %v2235 = vmul.f32 %v1967, %v2134
        %v2236 = vmul.f32 %v1968, %v2138
        %v2237 = vmul.f32 %v1969, %v2134
        %v2238 = vmul.f32 %v1970, %v2138
        %v2239 = vmul.f32 %v1971, %v2134
        %v2240 = vmul.f32 %v1972, %v2138
        %v2241 = vmul.f32 %v1973, %v2134
        %v2242 = vmul.f32 %v1974, %v2138
        %v2243 = vmul.f32 %v1975, %v2134
        %v2244 = vmul.f32 %v1976, %v2138
        %v2245 = vmul.f32 %v1977, %v2134
        %v2246 = vmul.f32 %v1978, %v2138
        %v2247 = vmul.f32 %v1979, %v2134
        %v2248 = vmul.f32 %v1980, %v2138
        %v2249 = vmul.f32 %v1981, %v2134
        %v2250 = vmul.f32 %v1982, %v2138
        %v2251 = vmul.f32 %v1983, %v2134
        %v2252 = vmul.f32 %v1984, %v2138
        %v2253 = vmul.f32 %v1985, %v2134
        %v2254 = vmul.f32 %v1986, %v2138
        %v2255 = vmul.f32 %v1987, %v2134
        %v2256 = vmul.f32 %v1988, %v2138
        %v2257 = vmul.f32 %v1989, %v2134
        %v2258 = vmul.f32 %v1990, %v2138
        %v2259 = vmul.f32 %v1991, %v2134
        %v2260 = vmul.f32 %v1992, %v2138
        %v2261 = vmul.f32 %v1993, %v2134
        %v2262 = vmul.f32 %v1994, %v2138
        %v2263 = vmul.f32 %v1995, %v2134
        %v2264 = vmul.f32 %v1996, %v2138
        %v2265 = vmul.f32 %v1997, %v2134
        %v2266 = vmul.f32 %v1998, %v2138
        %v2267 = vmul.f32 %v1999, %v2134
        %v2268 = vmul.f32 %v2000, %v2138
        %v2269 = vmul.f32 %v2001, %v2134
        %v2270 = vmul.f32 %v2002, %v2138
        %v2271 = vmul.f32 %v2003, %v2134
        %v2272 = vmul.f32 %v2004, %v2138
        %v2273 = vmul.f32 %v2005, %v2134
        %v2274 = vmul.f32 %v2006, %v2138
        %v2275 = vmul.f32 %v2007, %v2134
        %v2276 = vmul.f32 %v2008, %v2138
        %v2277 = vmul.f32 %v2009, %v2134
        %v2278 = vmul.f32 %v2010, %v2138
        %v2279 = vmul.f32 %v2011, %v2134
        %v2280 = vmul.f32 %v2012, %v2138
        %v2281 = vmul.f32 %v2013, %v2134
        %v2282 = vmul.f32 %v2014, %v2138
        %v2283 = vmul.f32 %v2015, %v2134
        %v2284 = vmul.f32 %v2016, %v2138
        %v2285 = vmul.f32 %v2017, %v2134
        %v2286 = vmul.f32 %v2018, %v2138
        %v2287 = vmul.f32 %v2019, %v2134
        %v2288 = vmul.f32 %v2020, %v2138
        %v2289 = vmul.f32 %v2021, %v2134
        %v2290 = vmul.f32 %v2022, %v2138
        %v2291 = vmul.f32 %v2023, %v2134
        %v2292 = vmul.f32 %v2024, %v2138
        %v2293 = vmul.f32 %v2025, %v2134
        %v2294 = vmul.f32 %v2026, %v2138
        %v2295 = vmul.f32 %v2027, %v2134
        %v2296 = vmul.f32 %v2028, %v2138
        %v2297 = vmul.f32 %v2029, %v2134
        %v2298 = vmul.f32 %v2030, %v2138
        %v2299 = vmul.f32 %v2031, %v2134
        %v2300 = vmul.f32 %v2032, %v2138
        %v2301 = vmul.f32 %v2033, %v2134
        %v2302 = vmul.f32 %v2034, %v2138
        %v2303 = vmul.f32 %v2035, %v2134
        %v2304 = vmul.f32 %v2036, %v2138
        %v2305 = vmul.f32 %v2037, %v2134
        %v2306 = vmul.f32 %v2038, %v2138
        %v2307 = vmul.f32 %v2039, %v2134
        %v2308 = vmul.f32 %v2040, %v2138
        %v2309 = vmul.f32 %v2041, %v2134
        %v2310 = vmul.f32 %v2042, %v2138
        %v2311 = vmul.f32 %v2043, %v2134
        %v2312 = vmul.f32 %v2044, %v2138
        %v2313 = vmul.f32 %v2045, %v2134
        %v2314 = vmul.f32 %v2046, %v2138
        %v2315 = vmul.f32 %v2047, %v2134
        %v2316 = vmul.f32 %v2048, %v2138
        %v2317 = vmul.f32 %v2049, %v2134
        %v2318 = vmul.f32 %v2050, %v2138
        %v2319 = vmul.f32 %v2051, %v2134
        %v2320 = vmul.f32 %v2052, %v2138
        %v2321 = vmul.f32 %v2053, %v2134
        %v2322 = vmul.f32 %v2054, %v2138
        %v2323 = vmul.f32 %v2055, %v2134
        %v2324 = vmul.f32 %v2056, %v2138
        %v2325 = vmul.f32 %v2057, %v2134
        %v2326 = vmul.f32 %v2058, %v2138
        %v2327 = vmul.f32 %v2059, %v2134
        %v2328 = vmul.f32 %v2060, %v2138
        %v2329 = vmul.f32 %v2061, %v2134
        %v2330 = vmul.f32 %v2062, %v2138
        %v2331 = vmul.f32 %v2063, %v2134
        %v2332 = vmul.f32 %v2064, %v2138
        %v2333 = vmul.f32 %v2065, %v2134
        %v2334 = vmul.f32 %v2066, %v2138
        %v2335 = vmul.f32 %v2067, %v2134
        %v2336 = vmul.f32 %v2068, %v2138
        %v2337 = vmul.f32 %v2069, %v2134
        %v2338 = vmul.f32 %v2070, %v2138
        %v2339 = vmul.f32 %v2071, %v2134
        %v2340 = vmul.f32 %v2072, %v2138
        %v2341 = vmul.f32 %v2073, %v2134
        %v2342 = vmul.f32 %v2074, %v2138
        %v2343 = vmul.f32 %v2075, %v2134
        %v2344 = vmul.f32 %v2076, %v2138
        %v2345 = vmul.f32 %v2077, %v2134
        %v2346 = vmul.f32 %v2078, %v2138
        %v2347 = vmul.f32 %v2079, %v2134
        %v2348 = vmul.f32 %v2080, %v2138
        %v2349 = vmul.f32 %v2081, %v2134
        %v2350 = vmul.f32 %v2082, %v2138
        %v2351 = vmul.f32 %v2083, %v2134
        %v2352 = vmul.f32 %v2084, %v2138
        %v2353 = vmul.f32 %v2085, %v2134
        %v2354 = vmul.f32 %v2086, %v2138
        %v2355 = vmul.f32 %v2087, %v2134
        %v2356 = vmul.f32 %v2088, %v2138
        %v2357 = vmul.f32 %v2089, %v2134
        %v2358 = vmul.f32 %v2090, %v2138
        %v2359 = vmul.f32 %v2091, %v2134
        %v2360 = vmul.f32 %v2092, %v2138
        %v2361 = vmul.f32 %v2093, %v2134
        %v2362 = vmul.f32 %v2094, %v2138
        %v2363 = vmul.f32 %v2095, %v2134
        %v2364 = vmul.f32 %v2096, %v2138
        %v2365 = vmul.f32 %v2097, %v2134
        %v2366 = vmul.f32 %v2098, %v2138
        %v2367 = vmul.f32 %v2099, %v2134
        %v2368 = vmul.f32 %v2100, %v2138
        %v2369 = vmul.f32 %v2101, %v2134
        %v2370 = vmul.f32 %v2102, %v2138
        %v2371 = vmul.f32 %v2103, %v2134
        %v2372 = vmul.f32 %v2104, %v2138
        %v2373 = vmul.f32 %v2105, %v2134
        %v2374 = vmul.f32 %v2106, %v2138
        %v2375 = vmul.f32 %v2107, %v2134
        %v2376 = vmul.f32 %v2108, %v2138
        %v2377 = vmul.f32 %v2109, %v2134
        %v2378 = vmul.f32 %v2110, %v2138
        %v2379 = vmul.f32 %v2111, %v2134
        %v2380 = vmul.f32 %v2112, %v2138
        %v2381 = vmul.f32 %v2113, %v2134
        %v2382 = vmul.f32 %v2114, %v2138
        %v2383 = vmul.f32 %v2115, %v2134
        %v2384 = vmul.f32 %v2116, %v2138
        %v2385 = vmul.f32 %v2117, %v2134
        %v2386 = vmul.f32 %v2118, %v2138
        %v2387 = vmul.f32 %v2119, %v2134
        %v2388 = vmul.f32 %v2120, %v2138
        %v2389 = vmul.f32 %v2121, %v2134
        %v2390 = vmul.f32 %v2122, %v2138
        %v2391 = vmul.f32 %v2123, %v2134
        %v2392 = vmul.f32 %v2124, %v2138
        %v2393 = vmul.f32 %v2125, %v2134
        %v2394 = vmul.f32 %v2126, %v2138
        %v2395 = vmul.f32 %v2127, %v2134
        %v2396 = vmul.f32 %v2128, %v2138
        %v2397 = vpack.c.bf16 %v2143, %v2141
        %v2398 = vpack.c.bf16 %v2144, %v2142
        %v2399 = vpack.c.bf16 %v2147, %v2145
        %v2400 = vpack.c.bf16 %v2148, %v2146
        %v2401 = vpack.c.bf16 %v2151, %v2149
        %v2402 = vpack.c.bf16 %v2152, %v2150
        %v2403 = vpack.c.bf16 %v2155, %v2153
        %v2404 = vpack.c.bf16 %v2156, %v2154
        %v2405 = vpack.c.bf16 %v2159, %v2157
        %v2406 = vpack.c.bf16 %v2160, %v2158
        %v2407 = vpack.c.bf16 %v2163, %v2161
        %v2408 = vpack.c.bf16 %v2164, %v2162
        %v2409 = vpack.c.bf16 %v2167, %v2165
        %v2410 = vpack.c.bf16 %v2168, %v2166
        %v2411 = vpack.c.bf16 %v2171, %v2169
        %v2412 = vpack.c.bf16 %v2172, %v2170
        %v2413 = vpack.c.bf16 %v2175, %v2173
        %v2414 = vpack.c.bf16 %v2176, %v2174
        %v2415 = vpack.c.bf16 %v2179, %v2177
        %v2416 = vpack.c.bf16 %v2180, %v2178
        %v2417 = vpack.c.bf16 %v2183, %v2181
        %v2418 = vpack.c.bf16 %v2184, %v2182
        %v2419 = vpack.c.bf16 %v2187, %v2185
        %v2420 = vpack.c.bf16 %v2188, %v2186
        %v2421 = vpack.c.bf16 %v2191, %v2189
        %v2422 = vpack.c.bf16 %v2192, %v2190
        %v2423 = vpack.c.bf16 %v2195, %v2193
        %v2424 = vpack.c.bf16 %v2196, %v2194
        %v2425 = vpack.c.bf16 %v2199, %v2197
        %v2426 = vpack.c.bf16 %v2200, %v2198
        %v2427 = vpack.c.bf16 %v2203, %v2201
        %v2428 = vpack.c.bf16 %v2204, %v2202
        %v2429 = vpack.c.bf16 %v2207, %v2205
        %v2430 = vpack.c.bf16 %v2208, %v2206
        %v2431 = vpack.c.bf16 %v2211, %v2209
        %v2432 = vpack.c.bf16 %v2212, %v2210
        %v2433 = vpack.c.bf16 %v2215, %v2213
        %v2434 = vpack.c.bf16 %v2216, %v2214
        %v2435 = vpack.c.bf16 %v2219, %v2217
        %v2436 = vpack.c.bf16 %v2220, %v2218
        %v2437 = vpack.c.bf16 %v2223, %v2221
        %v2438 = vpack.c.bf16 %v2224, %v2222
        %v2439 = vpack.c.bf16 %v2227, %v2225
        %v2440 = vpack.c.bf16 %v2228, %v2226
        %v2441 = vpack.c.bf16 %v2231, %v2229
        %v2442 = vpack.c.bf16 %v2232, %v2230
        %v2443 = vpack.c.bf16 %v2235, %v2233
        %v2444 = vpack.c.bf16 %v2236, %v2234
        %v2445 = vpack.c.bf16 %v2239, %v2237
        %v2446 = vpack.c.bf16 %v2240, %v2238
        %v2447 = vpack.c.bf16 %v2243, %v2241
        %v2448 = vpack.c.bf16 %v2244, %v2242
        %v2449 = vpack.c.bf16 %v2247, %v2245
        %v2450 = vpack.c.bf16 %v2248, %v2246
        %v2451 = vpack.c.bf16 %v2251, %v2249
        %v2452 = vpack.c.bf16 %v2252, %v2250
        %v2453 = vpack.c.bf16 %v2255, %v2253
        %v2454 = vpack.c.bf16 %v2256, %v2254
        %v2455 = vpack.c.bf16 %v2259, %v2257
        %v2456 = vpack.c.bf16 %v2260, %v2258
        %v2457 = vpack.c.bf16 %v2263, %v2261
        %v2458 = vpack.c.bf16 %v2264, %v2262
        %v2459 = vpack.c.bf16 %v2267, %v2265
        %v2460 = vpack.c.bf16 %v2268, %v2266
        %v2461 = vpack.c.bf16 %v2271, %v2269
        %v2462 = vpack.c.bf16 %v2272, %v2270
        %v2463 = vpack.c.bf16 %v2275, %v2273
        %v2464 = vpack.c.bf16 %v2276, %v2274
        %v2465 = vpack.c.bf16 %v2279, %v2277
        %v2466 = vpack.c.bf16 %v2280, %v2278
        %v2467 = vpack.c.bf16 %v2283, %v2281
        %v2468 = vpack.c.bf16 %v2284, %v2282
        %v2469 = vpack.c.bf16 %v2287, %v2285
        %v2470 = vpack.c.bf16 %v2288, %v2286
        %v2471 = vpack.c.bf16 %v2291, %v2289
        %v2472 = vpack.c.bf16 %v2292, %v2290
        %v2473 = vpack.c.bf16 %v2295, %v2293
        %v2474 = vpack.c.bf16 %v2296, %v2294
        %v2475 = vpack.c.bf16 %v2299, %v2297
        %v2476 = vpack.c.bf16 %v2300, %v2298
        %v2477 = vpack.c.bf16 %v2303, %v2301
        %v2478 = vpack.c.bf16 %v2304, %v2302
        %v2479 = vpack.c.bf16 %v2307, %v2305
        %v2480 = vpack.c.bf16 %v2308, %v2306
        %v2481 = vpack.c.bf16 %v2311, %v2309
        %v2482 = vpack.c.bf16 %v2312, %v2310
        %v2483 = vpack.c.bf16 %v2315, %v2313
        %v2484 = vpack.c.bf16 %v2316, %v2314
        %v2485 = vpack.c.bf16 %v2319, %v2317
        %v2486 = vpack.c.bf16 %v2320, %v2318
        %v2487 = vpack.c.bf16 %v2323, %v2321
        %v2488 = vpack.c.bf16 %v2324, %v2322
        %v2489 = vpack.c.bf16 %v2327, %v2325
        %v2490 = vpack.c.bf16 %v2328, %v2326
        %v2491 = vpack.c.bf16 %v2331, %v2329
        %v2492 = vpack.c.bf16 %v2332, %v2330
        %v2493 = vpack.c.bf16 %v2335, %v2333
        %v2494 = vpack.c.bf16 %v2336, %v2334
        %v2495 = vpack.c.bf16 %v2339, %v2337
        %v2496 = vpack.c.bf16 %v2340, %v2338
        %v2497 = vpack.c.bf16 %v2343, %v2341
        %v2498 = vpack.c.bf16 %v2344, %v2342
        %v2499 = vpack.c.bf16 %v2347, %v2345
        %v2500 = vpack.c.bf16 %v2348, %v2346
        %v2501 = vpack.c.bf16 %v2351, %v2349
        %v2502 = vpack.c.bf16 %v2352, %v2350
        %v2503 = vpack.c.bf16 %v2355, %v2353
        %v2504 = vpack.c.bf16 %v2356, %v2354
        %v2505 = vpack.c.bf16 %v2359, %v2357
        %v2506 = vpack.c.bf16 %v2360, %v2358
        %v2507 = vpack.c.bf16 %v2363, %v2361
        %v2508 = vpack.c.bf16 %v2364, %v2362
        %v2509 = vpack.c.bf16 %v2367, %v2365
        %v2510 = vpack.c.bf16 %v2368, %v2366
        %v2511 = vpack.c.bf16 %v2371, %v2369
        %v2512 = vpack.c.bf16 %v2372, %v2370
        %v2513 = vpack.c.bf16 %v2375, %v2373
        %v2514 = vpack.c.bf16 %v2376, %v2374
        %v2515 = vpack.c.bf16 %v2379, %v2377
        %v2516 = vpack.c.bf16 %v2380, %v2378
        %v2517 = vpack.c.bf16 %v2383, %v2381
        %v2518 = vpack.c.bf16 %v2384, %v2382
        %v2519 = vpack.c.bf16 %v2387, %v2385
        %v2520 = vpack.c.bf16 %v2388, %v2386
        %v2521 = vpack.c.bf16 %v2391, %v2389
        %v2522 = vpack.c.bf16 %v2392, %v2390
        %v2523 = vpack.c.bf16 %v2395, %v2393
        %v2524 = vpack.c.bf16 %v2396, %v2394
        %v2525 = vld [vmem:[#allocation2] sm:$0xff]
        %v2526 = vld [vmem:[#allocation2 + $0x8] sm:$0xff]
        %v2527 = vld [vmem:[#allocation2 + $0x10] sm:$0xff]
        %v2528 = vld [vmem:[#allocation2 + $0x18] sm:$0xff]
        %v2529 = vld [vmem:[#allocation2 + $0x20] sm:$0xff]
        %v2530 = vld [vmem:[#allocation2 + $0x28] sm:$0xff]
        %v2531 = vld [vmem:[#allocation2 + $0x30] sm:$0xff]
        %v2532 = vld [vmem:[#allocation2 + $0x38] sm:$0xff]
        %v2533 = vld [vmem:[%s422] sm:$0x3]
        %v2535 = vlaneseq
        %v2536 = vshrl.u32 %v2535, 7
        %v2537 = vsub.s32 0, %v2536
        %v2538 = vrot.slane %v2533, %v2537
        %v2539 = vlaneseq
        %v2540 = vshrl.u32 %v2539, 7
        %v2541 = vsub.s32 1, %v2540
        %v2542 = vrot.slane %v2533, %v2541
        %v2553 = vunpack.c.l.b16 %v2525
        %v2554 = vunpack.c.h.b16 %v2525
        %v2555 = vunpack.c.l.b16 %v2526
        %v2556 = vunpack.c.h.b16 %v2526
        %v2557 = vunpack.c.l.b16 %v2527
        %v2558 = vunpack.c.h.b16 %v2527
        %v2559 = vunpack.c.l.b16 %v2528
        %v2560 = vunpack.c.h.b16 %v2528
        %v2561 = vunpack.c.l.b16 %v2529
        %v2562 = vunpack.c.h.b16 %v2529
        %v2563 = vunpack.c.l.b16 %v2530
        %v2564 = vunpack.c.h.b16 %v2530
        %v2565 = vunpack.c.l.b16 %v2531
        %v2566 = vunpack.c.h.b16 %v2531
        %v2567 = vunpack.c.l.b16 %v2532
        %v2568 = vunpack.c.h.b16 %v2532
        %v2569 = vpack.c.b16 %v2561, %v2553
        %v2570 = vpack.c.b16 %v2562, %v2554
        %v2571 = vpack.c.b16 %v2563, %v2555
        %v2572 = vpack.c.b16 %v2564, %v2556
        %v2573 = vpack.c.b16 %v2565, %v2557
        %v2574 = vpack.c.b16 %v2566, %v2558
        %v2575 = vpack.c.b16 %v2567, %v2559
        %v2576 = vpack.c.b16 %v2568, %v2560
        %2585 = vmatprep.subr.bf16.mxu0 %v2412
        %2586 = vmatpush1.bf16.msra.mxu0 %v2411
        %2587 = vmatprep.subr.bf16.mxu0 %v2410
        %2588 = vmatpush1.bf16.msra.mxu0 %v2409
        %2589 = vmatprep.subr.bf16.mxu0 %v2408
        %2590 = vmatpush1.bf16.msra.mxu0 %v2407
        %2591 = vmatprep.subr.bf16.mxu0 %v2406
        %2592 = vmatpush1.bf16.msra.mxu0 %v2405
        %2593 = vmatprep.subr.bf16.mxu0 %v2404
        %2594 = vmatpush1.bf16.msra.mxu0 %v2403
        %2595 = vmatprep.subr.bf16.mxu0 %v2402
        %2596 = vmatpush1.bf16.msra.mxu0 %v2401
        %2597 = vmatprep.subr.bf16.mxu0 %v2400
        %2598 = vmatpush1.bf16.msra.mxu0 %v2399
        %2599 = vmatprep.subr.bf16.mxu0 %v2398
        %2600 = vmatpush1.bf16.msra.mxu0 %v2397
        %2601 = vmatprep.subr.bf16.mxu0 %v2428
        %2602 = vmatpush2.bf16.msra.mxu0 %v2427
        %2603 = vmatprep.subr.bf16.mxu0 %v2426
        %2604 = vmatpush2.bf16.msra.mxu0 %v2425
        %2605 = vmatprep.subr.bf16.mxu0 %v2424
        %2606 = vmatpush2.bf16.msra.mxu0 %v2423
        %2607 = vmatprep.subr.bf16.mxu0 %v2422
        %2608 = vmatpush2.bf16.msra.mxu0 %v2421
        %2609 = vmatprep.subr.bf16.mxu0 %v2420
        %2610 = vmatpush2.bf16.msra.mxu0 %v2419
        %2611 = vmatprep.subr.bf16.mxu0 %v2418
        %2612 = vmatpush2.bf16.msra.mxu0 %v2417
        %2613 = vmatprep.subr.bf16.mxu0 %v2416
        %2614 = vmatpush2.bf16.msra.mxu0 %v2415
        %2615 = vmatprep.subr.bf16.mxu0 %v2414
        %2616 = vmatpush2.bf16.msra.mxu0 %v2413
        %2617 = vmatprep.mubr.bf16.mxu0 %v2570
        %2618 = vmatmul.mubr.bf16.gmra.mxu0 %v2569
        %v2619 = vpop.f32.mrf.mxu0
        %v2620 = vadd.f32 %v2538, %v2619
        %v2621 = vpop.f32.mrf.mxu0
        %v2622 = vadd.f32 %v2542, %v2621
        %v2623 = vpop.f32.mrf.mxu0
        %v2624 = vadd.f32 %v2538, %v2623
        %v2625 = vpop.f32.mrf.mxu0
        %v2626 = vadd.f32 %v2542, %v2625
        %2627 = vdwg.mxu0
        %2628 = vmatprep.subr.bf16.mxu0 %v2444
        %2629 = vmatpush1.bf16.msra.mxu0 %v2443
        %2630 = vmatprep.subr.bf16.mxu0 %v2442
        %2631 = vmatpush1.bf16.msra.mxu0 %v2441
        %2632 = vmatprep.subr.bf16.mxu0 %v2440
        %2633 = vmatpush1.bf16.msra.mxu0 %v2439
        %2634 = vmatprep.subr.bf16.mxu0 %v2438
        %2635 = vmatpush1.bf16.msra.mxu0 %v2437
        %2636 = vmatprep.subr.bf16.mxu0 %v2436
        %2637 = vmatpush1.bf16.msra.mxu0 %v2435
        %2638 = vmatprep.subr.bf16.mxu0 %v2434
        %2639 = vmatpush1.bf16.msra.mxu0 %v2433
        %2640 = vmatprep.subr.bf16.mxu0 %v2432
        %2641 = vmatpush1.bf16.msra.mxu0 %v2431
        %2642 = vmatprep.subr.bf16.mxu0 %v2430
        %2643 = vmatpush1.bf16.msra.mxu0 %v2429
        %2644 = vmatprep.subr.bf16.mxu0 %v2460
        %2645 = vmatpush2.bf16.msra.mxu0 %v2459
        %2646 = vmatprep.subr.bf16.mxu0 %v2458
        %2647 = vmatpush2.bf16.msra.mxu0 %v2457
        %2648 = vmatprep.subr.bf16.mxu0 %v2456
        %2649 = vmatpush2.bf16.msra.mxu0 %v2455
        %2650 = vmatprep.subr.bf16.mxu0 %v2454
        %2651 = vmatpush2.bf16.msra.mxu0 %v2453
        %2652 = vmatprep.subr.bf16.mxu0 %v2452
        %2653 = vmatpush2.bf16.msra.mxu0 %v2451
        %2654 = vmatprep.subr.bf16.mxu0 %v2450
        %2655 = vmatpush2.bf16.msra.mxu0 %v2449
        %2656 = vmatprep.subr.bf16.mxu0 %v2448
        %2657 = vmatpush2.bf16.msra.mxu0 %v2447
        %2658 = vmatprep.subr.bf16.mxu0 %v2446
        %2659 = vmatpush2.bf16.msra.mxu0 %v2445
        %2660 = vmatprep.mubr.bf16.mxu0 %v2572
        %2661 = vmatmul.mubr.bf16.gmra.mxu0 %v2571
        %v2662 = vpop.f32.mrf.mxu0
        %v2663 = vadd.f32 %v2620, %v2662
        %v2664 = vpop.f32.mrf.mxu0
        %v2665 = vadd.f32 %v2622, %v2664
        %v2666 = vpop.f32.mrf.mxu0
        %v2667 = vadd.f32 %v2624, %v2666
        %v2668 = vpop.f32.mrf.mxu0
        %v2669 = vadd.f32 %v2626, %v2668
        %2670 = vdwg.mxu0
        %2671 = vmatprep.subr.bf16.mxu0 %v2476
        %2672 = vmatpush1.bf16.msra.mxu0 %v2475
        %2673 = vmatprep.subr.bf16.mxu0 %v2474
        %2674 = vmatpush1.bf16.msra.mxu0 %v2473
        %2675 = vmatprep.subr.bf16.mxu0 %v2472
        %2676 = vmatpush1.bf16.msra.mxu0 %v2471
        %2677 = vmatprep.subr.bf16.mxu0 %v2470
        %2678 = vmatpush1.bf16.msra.mxu0 %v2469
        %2679 = vmatprep.subr.bf16.mxu0 %v2468
        %2680 = vmatpush1.bf16.msra.mxu0 %v2467
        %2681 = vmatprep.subr.bf16.mxu0 %v2466
        %2682 = vmatpush1.bf16.msra.mxu0 %v2465
        %2683 = vmatprep.subr.bf16.mxu0 %v2464
        %2684 = vmatpush1.bf16.msra.mxu0 %v2463
        %2685 = vmatprep.subr.bf16.mxu0 %v2462
        %2686 = vmatpush1.bf16.msra.mxu0 %v2461
        %2687 = vmatprep.subr.bf16.mxu0 %v2492
        %2688 = vmatpush2.bf16.msra.mxu0 %v2491
        %2689 = vmatprep.subr.bf16.mxu0 %v2490
        %2690 = vmatpush2.bf16.msra.mxu0 %v2489
        %2691 = vmatprep.subr.bf16.mxu0 %v2488
        %2692 = vmatpush2.bf16.msra.mxu0 %v2487
        %2693 = vmatprep.subr.bf16.mxu0 %v2486
        %2694 = vmatpush2.bf16.msra.mxu0 %v2485
        %2695 = vmatprep.subr.bf16.mxu0 %v2484
        %2696 = vmatpush2.bf16.msra.mxu0 %v2483
        %2697 = vmatprep.subr.bf16.mxu0 %v2482
        %2698 = vmatpush2.bf16.msra.mxu0 %v2481
        %2699 = vmatprep.subr.bf16.mxu0 %v2480
        %2700 = vmatpush2.bf16.msra.mxu0 %v2479
        %2701 = vmatprep.subr.bf16.mxu0 %v2478
        %2702 = vmatpush2.bf16.msra.mxu0 %v2477
        %2703 = vmatprep.mubr.bf16.mxu0 %v2574
        %2704 = vmatmul.mubr.bf16.gmra.mxu0 %v2573
        %v2705 = vpop.f32.mrf.mxu0
        %v2706 = vadd.f32 %v2663, %v2705
        %v2707 = vpop.f32.mrf.mxu0
        %v2708 = vadd.f32 %v2665, %v2707
        %v2709 = vpop.f32.mrf.mxu0
        %v2710 = vadd.f32 %v2667, %v2709
        %v2711 = vpop.f32.mrf.mxu0
        %v2712 = vadd.f32 %v2669, %v2711
        %2713 = vdwg.mxu0
        %2714 = vmatprep.subr.bf16.mxu0 %v2508
        %2715 = vmatpush1.bf16.msra.mxu0 %v2507
        %2716 = vmatprep.subr.bf16.mxu0 %v2506
        %2717 = vmatpush1.bf16.msra.mxu0 %v2505
        %2718 = vmatprep.subr.bf16.mxu0 %v2504
        %2719 = vmatpush1.bf16.msra.mxu0 %v2503
        %2720 = vmatprep.subr.bf16.mxu0 %v2502
        %2721 = vmatpush1.bf16.msra.mxu0 %v2501
        %2722 = vmatprep.subr.bf16.mxu0 %v2500
        %2723 = vmatpush1.bf16.msra.mxu0 %v2499
        %2724 = vmatprep.subr.bf16.mxu0 %v2498
        %2725 = vmatpush1.bf16.msra.mxu0 %v2497
        %2726 = vmatprep.subr.bf16.mxu0 %v2496
        %2727 = vmatpush1.bf16.msra.mxu0 %v2495
        %2728 = vmatprep.subr.bf16.mxu0 %v2494
        %2729 = vmatpush1.bf16.msra.mxu0 %v2493
        %2730 = vmatprep.subr.bf16.mxu0 %v2524
        %2731 = vmatpush2.bf16.msra.mxu0 %v2523
        %2732 = vmatprep.subr.bf16.mxu0 %v2522
        %2733 = vmatpush2.bf16.msra.mxu0 %v2521
        %2734 = vmatprep.subr.bf16.mxu0 %v2520
        %2735 = vmatpush2.bf16.msra.mxu0 %v2519
        %2736 = vmatprep.subr.bf16.mxu0 %v2518
        %2737 = vmatpush2.bf16.msra.mxu0 %v2517
        %2738 = vmatprep.subr.bf16.mxu0 %v2516
        %2739 = vmatpush2.bf16.msra.mxu0 %v2515
        %2740 = vmatprep.subr.bf16.mxu0 %v2514
        %2741 = vmatpush2.bf16.msra.mxu0 %v2513
        %2742 = vmatprep.subr.bf16.mxu0 %v2512
        %2743 = vmatpush2.bf16.msra.mxu0 %v2511
        %2744 = vmatprep.subr.bf16.mxu0 %v2510
        %2745 = vmatpush2.bf16.msra.mxu0 %v2509
        %2746 = vmatprep.mubr.bf16.mxu0 %v2576
        %2747 = vmatmul.mubr.bf16.gmra.mxu0 %v2575
        %v2748 = vpop.f32.mrf.mxu0
        %v2749 = vadd.f32 %v2706, %v2748
        %v2750 = vpop.f32.mrf.mxu0
        %v2751 = vadd.f32 %v2708, %v2750
        %v2752 = vpop.f32.mrf.mxu0
        %v2753 = vadd.f32 %v2710, %v2752
        %v2754 = vpop.f32.mrf.mxu0
        %v2755 = vadd.f32 %v2712, %v2754
        %2756 = vdwg.mxu0
        %v2757 = vmul.f32 %v2749, 0.5
        %v2758 = vmul.f32 %v2751, 0.5
        %v2759 = vmul.f32 %v2753, 0.5
        %v2760 = vmul.f32 %v2755, 0.5
        %v2761 = vtanh.pop %v2757
        %v2762 = vtanh.pop %v2758
        %v2763 = vtanh.pop %v2759
        %v2764 = vtanh.pop %v2760
        %v2765 = vmul.f32 %v2761, 0.5
        %v2766 = vmul.f32 %v2762, 0.5
        %v2767 = vmul.f32 %v2763, 0.5
        %v2768 = vmul.f32 %v2764, 0.5
        %v2769 = vadd.f32 %v2765, 0.5
        %v2770 = vadd.f32 %v2766, 0.5
        %v2771 = vadd.f32 %v2767, 0.5
        %v2772 = vadd.f32 %v2768, 0.5
        %v2773 = vld [vmem:[#allocation3] sm:$0xff]
        %v2774 = vld [vmem:[#allocation3 + $0x8] sm:$0xff]
        %v2775 = vpack.c.bf16 %v2771, %v2769
        %v2776 = vpack.c.bf16 %v2772, %v2770
        %v2777 = vld [vmem:[%s428] sm:$0xf]
        %v2778 = vld [vmem:[%s428 + $0x4] sm:$0xf]
        %v2779 = vld [vmem:[%s428 + $0x8] sm:$0xf]
        %v2780 = vld [vmem:[%s428 + $0xc] sm:$0xf]
        %v2781 = vld [vmem:[%s428 + $0x10] sm:$0xf]
        %v2782 = vld [vmem:[%s428 + $0x14] sm:$0xf]
        %v2783 = vld [vmem:[%s428 + $0x18] sm:$0xf]
        %v2784 = vld [vmem:[%s428 + $0x1c] sm:$0xf]
        %v2785 = vld [vmem:[%s428 + $0x20] sm:$0xf]
        %v2786 = vld [vmem:[%s428 + $0x24] sm:$0xf]
        %v2787 = vld [vmem:[%s428 + $0x28] sm:$0xf]
        %v2788 = vld [vmem:[%s428 + $0x2c] sm:$0xf]
        %v2789 = vld [vmem:[%s428 + $0x30] sm:$0xf]
        %v2790 = vld [vmem:[%s428 + $0x34] sm:$0xf]
        %v2791 = vld [vmem:[%s428 + $0x38] sm:$0xf]
        %v2792 = vld [vmem:[%s428 + $0x3c] sm:$0xf]
        %v2793 = vld [vmem:[%s428 + $0x40] sm:$0xf]
        %v2794 = vld [vmem:[%s428 + $0x44] sm:$0xf]
        %v2795 = vld [vmem:[%s428 + $0x48] sm:$0xf]
        %v2796 = vld [vmem:[%s428 + $0x4c] sm:$0xf]
        %v2797 = vld [vmem:[%s428 + $0x50] sm:$0xf]
        %v2798 = vld [vmem:[%s428 + $0x54] sm:$0xf]
        %v2799 = vld [vmem:[%s428 + $0x58] sm:$0xf]
        %v2800 = vld [vmem:[%s428 + $0x5c] sm:$0xf]
        %v2801 = vld [vmem:[%s428 + $0x60] sm:$0xf]
        %v2802 = vld [vmem:[%s428 + $0x64] sm:$0xf]
        %v2803 = vld [vmem:[%s428 + $0x68] sm:$0xf]
        %v2804 = vld [vmem:[%s428 + $0x6c] sm:$0xf]
        %v2805 = vld [vmem:[%s428 + $0x70] sm:$0xf]
        %v2806 = vld [vmem:[%s428 + $0x74] sm:$0xf]
        %v2807 = vld [vmem:[%s428 + $0x78] sm:$0xf]
        %v2808 = vld [vmem:[%s428 + $0x7c] sm:$0xf]
        %v2841 = vunpack.c.l.b16 %v2777
        %v2842 = vunpack.c.l.b16 %v2778
        %v2843 = vunpack.c.l.b16 %v2779
        %v2844 = vunpack.c.l.b16 %v2780
        %v2845 = vunpack.c.l.b16 %v2781
        %v2846 = vunpack.c.l.b16 %v2782
        %v2847 = vunpack.c.l.b16 %v2783
        %v2848 = vunpack.c.l.b16 %v2784
        %v2849 = vunpack.c.l.b16 %v2785
        %v2850 = vunpack.c.l.b16 %v2786
        %v2851 = vunpack.c.l.b16 %v2787
        %v2852 = vunpack.c.l.b16 %v2788
        %v2853 = vunpack.c.l.b16 %v2789
        %v2854 = vunpack.c.l.b16 %v2790
        %v2855 = vunpack.c.l.b16 %v2791
        %v2856 = vunpack.c.l.b16 %v2792
        %v2857 = vunpack.c.l.b16 %v2793
        %v2858 = vunpack.c.l.b16 %v2794
        %v2859 = vunpack.c.l.b16 %v2795
        %v2860 = vunpack.c.l.b16 %v2796
        %v2861 = vunpack.c.l.b16 %v2797
        %v2862 = vunpack.c.l.b16 %v2798
        %v2863 = vunpack.c.l.b16 %v2799
        %v2864 = vunpack.c.l.b16 %v2800
        %v2865 = vunpack.c.l.b16 %v2801
        %v2866 = vunpack.c.l.b16 %v2802
        %v2867 = vunpack.c.l.b16 %v2803
        %v2868 = vunpack.c.l.b16 %v2804
        %v2869 = vunpack.c.l.b16 %v2805
        %v2870 = vunpack.c.l.b16 %v2806
        %v2871 = vunpack.c.l.b16 %v2807
        %v2872 = vunpack.c.l.b16 %v2808
        %v2873 = vpack.c.b16 %v2842, %v2841
        %v2874 = vpack.c.b16 %v2844, %v2843
        %v2875 = vpack.c.b16 %v2846, %v2845
        %v2876 = vpack.c.b16 %v2848, %v2847
        %v2877 = vpack.c.b16 %v2850, %v2849
        %v2878 = vpack.c.b16 %v2852, %v2851
        %v2879 = vpack.c.b16 %v2854, %v2853
        %v2880 = vpack.c.b16 %v2856, %v2855
        %v2881 = vpack.c.b16 %v2858, %v2857
        %v2882 = vpack.c.b16 %v2860, %v2859
        %v2883 = vpack.c.b16 %v2862, %v2861
        %v2884 = vpack.c.b16 %v2864, %v2863
        %v2885 = vpack.c.b16 %v2866, %v2865
        %v2886 = vpack.c.b16 %v2868, %v2867
        %v2887 = vpack.c.b16 %v2870, %v2869
        %v2888 = vpack.c.b16 %v2872, %v2871
        %2905 = vmatprep.subr.bf16.mxu0 0
        %2906 = vmatpush1.bf16.msra.mxu0 %v2880
        %2907 = vmatprep.subr.bf16.mxu0 0
        %2908 = vmatpush1.bf16.msra.mxu0 %v2879
        %2909 = vmatprep.subr.bf16.mxu0 0
        %2910 = vmatpush1.bf16.msra.mxu0 %v2878
        %2911 = vmatprep.subr.bf16.mxu0 0
        %2912 = vmatpush1.bf16.msra.mxu0 %v2877
        %2913 = vmatprep.subr.bf16.mxu0 0
        %2914 = vmatpush1.bf16.msra.mxu0 %v2876
        %2915 = vmatprep.subr.bf16.mxu0 0
        %2916 = vmatpush1.bf16.msra.mxu0 %v2875
        %2917 = vmatprep.subr.bf16.mxu0 0
        %2918 = vmatpush1.bf16.msra.mxu0 %v2874
        %2919 = vmatprep.subr.bf16.mxu0 0
        %2920 = vmatpush1.bf16.msra.mxu0 %v2873
        %2921 = vmatprep.subr.bf16.mxu0 0
        %2922 = vmatpush2.bf16.msra.mxu0 %v2888
        %2923 = vmatprep.subr.bf16.mxu0 0
        %2924 = vmatpush2.bf16.msra.mxu0 %v2887
        %2925 = vmatprep.subr.bf16.mxu0 0
        %2926 = vmatpush2.bf16.msra.mxu0 %v2886
        %2927 = vmatprep.subr.bf16.mxu0 0
        %2928 = vmatpush2.bf16.msra.mxu0 %v2885
        %2929 = vmatprep.subr.bf16.mxu0 0
        %2930 = vmatpush2.bf16.msra.mxu0 %v2884
        %2931 = vmatprep.subr.bf16.mxu0 0
        %2932 = vmatpush2.bf16.msra.mxu0 %v2883
        %2933 = vmatprep.subr.bf16.mxu0 0
        %2934 = vmatpush2.bf16.msra.mxu0 %v2882
        %2935 = vmatprep.subr.bf16.mxu0 0
        %2936 = vmatpush2.bf16.msra.mxu0 %v2881
        %2937 = vmatprep.mubr.bf16.mxu0 %v2776
        %2938 = vmatmul.mubr.bf16.gmra.mxu0 %v2775
        %v2939 = vpop.f32.mrf.mxu0
        %v2940 = vadd.f32 0.0, %v2939
        %v2941 = vpop.f32.mrf.mxu0
        %v2942 = vpop.f32.mrf.mxu0
        %v2943 = vadd.f32 0.0, %v2942
        %v2944 = vpop.f32.mrf.mxu0
        %2945 = vdwg.mxu0
        %v2946 = vadd.f32 %v2773, %v2940
        %v2947 = vadd.f32 %v2774, %v2943
        %vm2948 = vcmask 80896
        %2949 = vst.msk [vmem:[#allocation3] sm:$0xff] %vm2948, %v2946
        %2950 = vst.msk [vmem:[#allocation3 + $0x8] sm:$0xff] %vm2948, %v2947
        %p2951 = scmp.eq.s32.totalorder %s29, 3
        // Predicated region
        $region65: #{tpu_custom_call.1} parent=51 // pred_check
          %p2952 = pneg %p2951
        $region66: #{tpu_custom_call.1} parent=51 // pred_check_branch
          %2954 = sbr.rel (%p2952) target = $region68
        $region67: #{tpu_custom_call.1} parent=51 // pred_region
          %v2955 = vld [vmem:[#allocation3] sm:$0xff]
          %v2956 = vld [vmem:[#allocation3 + $0x8] sm:$0xff]
          %v2957 = vld [vmem:[%s7] sm:$0x1]
          %v2959 = vlaneseq
          %v2960 = vshrl.u32 %v2959, 7
          %v2961 = vsub.s32 0, %v2960
          %v2962 = vrot.slane %v2957, %v2961
          %v2964 = vadd.f32 %v2955, %v2962
          %v2965 = vadd.f32 %v2956, %v2962
          %v2966 = vmul.f32 %v2964, 0.5
          %v2967 = vmul.f32 %v2965, 0.5
          %v2968 = vtanh.pop %v2966
          %v2969 = vtanh.pop %v2967
          %v2970 = vmul.f32 %v2968, 0.5
          %v2971 = vmul.f32 %v2969, 0.5
          %v2972 = vadd.f32 %v2970, 0.5
          %v2973 = vadd.f32 %v2971, 0.5
          %2974 = vst.msk [vmem:[#allocation9] sm:$0xff] %vm2948, %v2972
          %2975 = vst.msk [vmem:[#allocation9 + $0x8] sm:$0xff] %vm2948, %v2973
        $region68: #{tpu_custom_call.1} parent=51 // pred_fallthru
          _
        // Predicated region
        $region69: #{tpu_custom_call.1} parent=51 // pred_check
          %p2976 = pneg %p247
        $region70: #{tpu_custom_call.1} parent=51 // pred_check_branch
          %2978 = sbr.rel (%p2976) target = $region72
        $region71: #{tpu_custom_call.1} parent=51 // pred_region
          %s2979 = smul.u32 2, %s28
          %s2981 = ssub.s32 256, 256
          %2982 = vsyncadd [#allocation6], %s2981
          %s2983 = smul.addr %s2979, 128
          %s2984 = scalar_lea.hbm %s8, %s2983
          %s2985 = sshll.u32 [#allocation9], 4
          %s2986 = int_to_ptr.vmem [resolvable:$true] %s2985
          %2991 = dma.vmem_to_hbm [thread:$0]  %s2986, 256, %s2984, [#allocation6], 128, 128, 8
        $region72: #{tpu_custom_call.1} parent=51 // pred_fallthru
          _
        // Predicated region
        $region73: #{tpu_custom_call.1} parent=51 // pred_check
          %p2992 = pneg %p247
        $region74: #{tpu_custom_call.1} parent=51 // pred_check_branch
          %2994 = sbr.rel (%p2992) target = $region76
        $region75: #{tpu_custom_call.1} parent=51 // pred_region
          %2995 = dma.done [#allocation6], 256
        $region76: #{tpu_custom_call.1} parent=51 // pred_fallthru
          _
      $region52: #{tpu_custom_call.1} parent=5 // pred_fallthru
        _
      %p2996 = scmp.le.s32.totalorder 2, %s19
      // Predicated region
      $region77: #{tpu_custom_call.1} parent=5 // pred_check
        %p2997 = pneg %p2996
      $region78: #{tpu_custom_call.1} parent=5 // pred_check_branch
        %2999 = sbr.rel (%p2997) target = $region80
      $region79: #{tpu_custom_call.1} parent=5 // pred_region
        %s3000 = ssub.s32 %s19, 2
      $region80: #{tpu_custom_call.1} parent=5 // pred_fallthru
        _
    $region6: #{tpu_custom_call.1} parent=1 // loop_footer
      %s23 = sadd.s32 1, %s19
    $region7: #{tpu_custom_call.1} parent=1 // loop_footer_branch
      %18 = sbr.rel target = $region3
    $region8: #{tpu_custom_call.1} parent=1 // loop_exit
      _
    %3001 = vsyncpa [#allocation5], 1
    %s3002 = scalar_lea.sflag [#allocation5], 1
    %3003 = vsyncpa %s3002, 1
    %3004 = vsyncpa [#allocation8], 1
    %s3005 = scalar_lea.sflag [#allocation8], 1
    %3006 = vsyncpa %s3005, 1
    %3007 = vsyncpa [#allocation6], 1
    %s3008 = scalar_lea.sflag [#allocation6], 1
    %3009 = vsyncpa %s3008, 1

</llo_original>
